<compile_context>
chip_gen: v7x
topology: tpu7x:2x2x1
jax: 0.10.0
libtpu: 0.0.40
codegen_flags: <defaults>
</compile_context>

<pallas_src>
from functools import partial
import math

import jax
import jax.numpy as jnp
from jax.experimental import pallas as pl
from jax.experimental.pallas import tpu as pltpu


def autopad(k, p=None, d=1):
    """Pad to 'same' shape outputs (matches the PyTorch helper)."""
    if d > 1:
        k = d * (k - 1) + 1 if isinstance(k, int) else [d * (x - 1) + 1 for x in k]
    if p is None:
        p = k // 2 if isinstance(k, int) else [x // 2 for x in k]
    return p


def _round_up(v, m):
    return (v + m - 1) // m * m


def _vmem_cap_bytes():
    """Per-generation VMEM budget: physical capacity with ~25% headroom."""
    try:
        phys = int(getattr(pltpu.get_tpu_info(), "vmem_capacity_bytes", 64 << 20))
    except Exception:
        phys = 64 << 20
    return max(32 << 20, (phys * 3) // 4)   # ~48 MiB (v7x), ~96 MiB (v5e/v6e)


# ----------------------------- Pallas kernel --------------------------------

def _conv_bn_act_kernel(xs_ref, w_ref, sh_ref, o_ref, *, tap_offsets, tap_len,
                        apply_silu):
    """One (batch, C2-tile, row-tile) output block.

    xs_ref : (Cin, Ls)      bf16  flattened (row-major) input slab
    w_ref  : (T, tc2, Cin)  bf16  conv weight taps (BN scale pre-folded)
    sh_ref : (tc2, 1)       f32   folded BN shift
    o_ref  : (tc2, L)             output tile (L = tap_len)
    """
    acc = jnp.zeros(o_ref.shape, jnp.float32)
    for t, off in enumerate(tap_offsets):
        tap = xs_ref[:, off:off + tap_len]        # static VMEM window, no HBM copy
        acc = acc + jnp.dot(w_ref[t], tap, preferred_element_type=jnp.float32)
    y = acc + sh_ref[...]                          # folded BN shift (f32)
    if apply_silu:
        y = y * jax.nn.sigmoid(y)                  # SiLU (EUP logistic)
    o_ref[...] = y.astype(o_ref.dtype)


def _launch(xs, w, shift, *, tap_offsets, tap_len, tc2, out_dtype, apply_silu,
            vmem_limit):
    B, n_j, Cin, Ls = xs.shape
    T, C2p, _ = w.shape
    L = tap_len
    # Row-tile axis is fastest -> the weight block index stays constant across
    # it, so the weight slab is not re-DMA'd per (batch, row-tile).
    grid = (B, C2p // tc2, n_j)

    return pl.pallas_call(
        partial(_conv_bn_act_kernel, tap_offsets=tap_offsets, tap_len=L,
                apply_silu=apply_silu),
        out_shape=jax.ShapeDtypeStruct((B, C2p, n_j * L), out_dtype),
        grid=grid,
        in_specs=[
            pl.BlockSpec((None, None, Cin, Ls), lambda b, c, j: (b, j, 0, 0)),
            pl.BlockSpec((T, tc2, Cin), lambda b, c, j: (0, c, 0)),
            pl.BlockSpec((tc2, 1), lambda b, c, j: (c, 0)),
        ],
        out_specs=pl.BlockSpec((None, tc2, L), lambda b, c, j: (b, c, j)),
        compiler_params=pltpu.CompilerParams(
            dimension_semantics=("parallel", "parallel", "parallel"),
            vmem_limit_bytes=int(vmem_limit)),
    )(xs, w, shift)


# ------------------------------- wrapper ------------------------------------

@partial(jax.jit, static_argnames=("k", "s", "p", "g", "d", "act",
                                   "out_dtype", "matmul_dtype"))
def conv_bn_act(x, weight, bn_gamma, bn_beta, bn_mean, bn_var,
                k=1, s=1, p=None, g=1, d=1, act=True, eps=1e-5,
                out_dtype=jnp.float32, matmul_dtype=jnp.bfloat16):
    """Forward of the `Conv` module: act(BN(Conv2d(x))).

    BatchNorm is applied in inference mode (running statistics).
    act=True -> SiLU (module default); act=False -> identity.
    """
    assert g == 1, "grouped convolution not supported"  # TODO(synk): groups > 1
    B, C1, H, W = x.shape
    C2 = weight.shape[0]
    K = int(k)
    pad = autopad(K, p, d)
    Ho = (H + 2 * pad - d * (K - 1) - 1) // s + 1
    Wo = (W + 2 * pad - d * (K - 1) - 1) // s + 1

    # Fold inference-mode BN: scale goes into the weight (f32, before the bf16
    # cast); only the per-channel shift stays in the epilogue.
    inv = jax.lax.rsqrt(bn_var.astype(jnp.float32) + eps)
    scale = bn_gamma.astype(jnp.float32) * inv
    shift = bn_beta.astype(jnp.float32) - bn_mean.astype(jnp.float32) * scale
    w_scaled = weight.astype(jnp.float32) * scale[:, None, None, None]

    C2p = _round_up(C2, 8)
    tc2 = C2p if C2p <= 512 else 256
    C2p = _round_up(C2p, tc2)
    shift_p = jnp.pad(shift, (0, C2p - C2)).reshape(C2p, 1)

    cap = _vmem_cap_bytes()
    ebytes = jnp.dtype(matmul_dtype).itemsize
    obytes = jnp.dtype(out_dtype).itemsize
    apply_silu = bool(act)

    if s == 1:
        # ---- fast path: taps formed in-kernel; no K^2 im2col in HBM --------
        Hp, Wp = H + 2 * pad, W + 2 * pad
        Cin = _round_up(C1, 8)
        T = K * K
        tap_offsets = tuple((ky * Wp + kx) * d
                            for ky in range(K) for kx in range(K))

        # Output-row tile sized against the VMEM budget; lane-dense blocks
        # (tR*Wp % 128 == 0) unless the whole image fits in one tile.
        fixed = 2 * (T * tc2 * Cin * ebytes + tc2 * 4)
        per_row = Wp * (2 * Cin * ebytes + tc2 * (2 * obytes + 4))
        budget = max((cap * 4) // 5 - fixed, 2 << 20)
        if Ho * per_row <= budget:
            tR = Ho
        else:
            step = 128 // math.gcd(Wp, 128)
            tR = max(step, (budget // per_row) // step * step)
        n_j = -(-Ho // tR)
        Ho_p = n_j * tR
        L = tR * Wp
        Ls = L + (K - 1) * d * (Wp + 1)

        x_pad = jnp.pad(x, ((0, 0), (0, Cin - C1), (pad, pad), (pad, pad)))
        xf = x_pad.reshape(B, Cin, Hp * Wp).astype(matmul_dtype)
        need = (n_j - 1) * L + Ls
        if need > Hp * Wp:
            xf = jnp.pad(xf, ((0, 0), (0, 0), (0, need - Hp * Wp)))
        # Overlapping per-row-tile windows (overlap is (K-1)*d rows; zero extra
        # HBM traffic when a single whole-image tile is used).
        xs = jnp.stack([xf[:, :, j * L:j * L + Ls] for j in range(n_j)], axis=1)

        wf = jnp.pad(w_scaled, ((0, C2p - C2), (0, Cin - C1), (0, 0), (0, 0)))
        wf = wf.transpose(2, 3, 0, 1).reshape(T, C2p, Cin).astype(matmul_dtype)
    else:
        # ---- stride > 1: wrapper-side im2col (inflation only K^2/s^2) ------
        # TODO(synk): form strided taps in-kernel as well (needs strided VMEM
        # slices); for stride > 1 the im2col inflation is already small.
        CK = C1 * K * K
        Cin = _round_up(CK, 8)
        T = 1
        tap_offsets = (0,)
        HWo = Ho * Wo

        x_pad = jnp.pad(x, ((0, 0), (0, 0), (pad, pad), (pad, pad)))
        taps = []
        for ky in range(K):
            for kx in range(K):
                y0, x0 = ky * d, kx * d
                patch = x_pad[:, :,
                              y0:y0 + (Ho - 1) * s + 1:s,
                              x0:x0 + (Wo - 1) * s + 1:s]     # (B, C1, Ho, Wo)
                taps.append(patch.reshape(B, C1, HWo))
        cols = jnp.stack(taps, axis=2).reshape(B, CK, HWo)    # (c1, ky, kx) order
        cols = jnp.pad(cols, ((0, 0), (0, Cin - CK), (0, 0))).astype(matmul_dtype)

        fixed = 2 * (tc2 * Cin * ebytes + tc2 * 4)
        per_col = 2 * Cin * ebytes + tc2 * (2 * obytes + 4)
        budget = max((cap * 4) // 5 - fixed, 2 << 20)
        if HWo * per_col <= budget:
            tL, n_j = HWo, 1
        else:
            tL = max(128, (budget // per_col) // 128 * 128)
            n_j = -(-HWo // tL)
        L = Ls = tL
        if n_j * tL > HWo:
            cols = jnp.pad(cols, ((0, 0), (0, 0), (0, n_j * tL - HWo)))
        xs = jnp.stack([cols[:, :, j * tL:(j + 1) * tL] for j in range(n_j)],
                       axis=1)

        wf = w_scaled.reshape(C2, CK)
        wf = jnp.pad(wf, ((0, C2p - C2), (0, Cin - CK)))
        wf = wf.reshape(1, C2p, Cin).astype(matmul_dtype)

    out = _launch(xs, wf, shift_p, tap_offsets=tap_offsets, tap_len=L, tc2=tc2,
                  out_dtype=out_dtype, apply_silu=apply_silu, vmem_limit=cap)

    if s == 1:
        # Output is flattened over (rows, padded width); drop padded cols/rows.
        out = out.reshape(B, C2p, Ho_p, Wp)[:, :C2, :Ho, :Wo]
    else:
        out = out[:, :C2, :Ho * Wo].reshape(B, C2, Ho, Wo)
    return out


# ------------------------------ reference -----------------------------------

def conv_bn_act_reference(x, weight, bn_gamma, bn_beta, bn_mean, bn_var,
                          k=1, s=1, p=None, d=1, act=True, eps=1e-5):
    pad = autopad(k, p, d)
    y = jax.lax.conv_general_dilated(
        x, weight, window_strides=(s, s), padding=[(pad, pad), (pad, pad)],
        rhs_dilation=(d, d), dimension_numbers=("NCHW", "OIHW", "NCHW"))
    inv = jax.lax.rsqrt(bn_var + eps)
    scale = (bn_gamma * inv)[None, :, None, None]
    shift = (bn_beta - bn_mean * bn_gamma * inv)[None, :, None, None]
    y = y * scale + shift
    return y * jax.nn.sigmoid(y) if act else y


# --------------------------------- main --------------------------------------

if __name__ == "__main__":
    key = jax.random.PRNGKey(0)
    kx_, kw_, kg_, kb_, km_, kv_ = jax.random.split(key, 6)

    B, C1, C2, H, W = 2, 4, 8, 16, 16
    x = jax.random.normal(kx_, (B, C1, H, W), jnp.float32)
    gamma = 1.0 + 0.1 * jax.random.normal(kg_, (C2,), jnp.float32)
    beta = 0.1 * jax.random.normal(kb_, (C2,), jnp.float32)
    mean = 0.1 * jax.random.normal(km_, (C2,), jnp.float32)
    var = 0.9 + 0.1 * jnp.abs(jax.random.normal(kv_, (C2,), jnp.float32))

    # (k, s): 3x3 'same' and 1x1 hit the in-kernel tap path; the strided cases
    # hit the im2col fallback path.
    for (K, S) in [(3, 1), (1, 1), (1, 2), (3, 2)]:
        w = jax.random.normal(kw_, (C2, C1, K, K), jnp.float32) \
            * (2.0 / (C1 * K * K)) ** 0.5

        out = conv_bn_act(x, w, gamma, beta, mean, var, k=K, s=S, act=True)
        out = jax.block_until_ready(out)

        ref = conv_bn_act_reference(x, w, gamma, beta, mean, var, k=K, s=S,
                                    act=True)
        pad = autopad(K)
        Ho = (H + 2 * pad - K) // S + 1
        Wo = (W + 2 * pad - K) // S + 1
        assert out.shape == (B, C2, Ho, Wo), out.shape
        assert bool(jnp.all(jnp.isfinite(out)))
        err = float(jnp.max(jnp.abs(out - ref)))
        assert err < 1e-1, f"max abs err {err} (k={K}, s={S})"

    print("KERNEL_OK")
</pallas_src>

<mosaic_0001>
module attributes {stable_mosaic.version = 11 : i64} {
  func.func @_conv_bn_act_kernel(%arg0: i32, %arg1: i32, %arg2: i32, %arg3: memref<1x1x8x326xbf16, #tpu.memory_space<vmem>>, %arg4: memref<9x8x8xbf16, #tpu.memory_space<vmem>>, %arg5: memref<8x1xf32, #tpu.memory_space<vmem>>, %arg6: memref<1x8x288xf32, #tpu.memory_space<vmem>>) attributes {dimension_semantics = [#tpu.dimension_semantics<parallel>, #tpu.dimension_semantics<parallel>, #tpu.dimension_semantics<parallel>], iteration_bounds = array<i64: 2, 1, 1>, scalar_prefetch = 0 : i64, scratch_operands = 0 : i64, tpu.core_type = #tpu.core_type<tc>, window_params = [{transform_indices = @transform_0, window_bounds = array<i64: 1, 1, 8, 326>}, {transform_indices = @transform_1, window_bounds = array<i64: 9, 8, 8>}, {transform_indices = @transform_2, window_bounds = array<i64: 8, 1>}, {transform_indices = @transform_3, window_bounds = array<i64: 1, 8, 288>}]} {
    %cst = arith.constant 0.000000e+00 : f32
    %0 = vector.broadcast %cst : f32 to vector<8x288xf32>
    %c0 = arith.constant 0 : index
    %c0_0 = arith.constant 0 : index
    %c0_1 = arith.constant 0 : index
    %c0_2 = arith.constant 0 : index
    %1 = vector.load %arg3[%c0, %c0_0, %c0_1, %c0_2] : memref<1x1x8x326xbf16, #tpu.memory_space<vmem>>, vector<1x1x8x288xbf16>
    %2 = vector.shape_cast %1 : vector<1x1x8x288xbf16> to vector<8x288xbf16>
    %c0_3 = arith.constant 0 : index
    %c0_4 = arith.constant 0 : index
    %c0_5 = arith.constant 0 : index
    %3 = vector.load %arg4[%c0_3, %c0_4, %c0_5] : memref<9x8x8xbf16, #tpu.memory_space<vmem>>, vector<1x8x8xbf16>
    %4 = vector.shape_cast %3 : vector<1x8x8xbf16> to vector<8x8xbf16>
    %cst_6 = arith.constant dense<0.000000e+00> : vector<8x288xf32>
    %5 = tpu.matmul %4, %2, %cst_6 {dimension_numbers = #tpu.dot_dimension_numbers<[1], [0], [0], [1], [0, 0, 1, 1], [], []>} : vector<8x8xbf16>, vector<8x288xbf16>, vector<8x288xf32> -> vector<8x288xf32>
    %6 = arith.addf %0, %5 : vector<8x288xf32>
    %c0_7 = arith.constant 0 : index
    %c0_8 = arith.constant 0 : index
    %c0_9 = arith.constant 0 : index
    %c1 = arith.constant 1 : index
    %7 = vector.load %arg3[%c0_7, %c0_8, %c0_9, %c1] : memref<1x1x8x326xbf16, #tpu.memory_space<vmem>>, vector<1x1x8x288xbf16>
    %8 = vector.shape_cast %7 : vector<1x1x8x288xbf16> to vector<8x288xbf16>
    %c1_10 = arith.constant 1 : index
    %c0_11 = arith.constant 0 : index
    %c0_12 = arith.constant 0 : index
    %9 = vector.load %arg4[%c1_10, %c0_11, %c0_12] : memref<9x8x8xbf16, #tpu.memory_space<vmem>>, vector<1x8x8xbf16>
    %10 = vector.shape_cast %9 : vector<1x8x8xbf16> to vector<8x8xbf16>
    %cst_13 = arith.constant dense<0.000000e+00> : vector<8x288xf32>
    %11 = tpu.matmul %10, %8, %cst_13 {dimension_numbers = #tpu.dot_dimension_numbers<[1], [0], [0], [1], [0, 0, 1, 1], [], []>} : vector<8x8xbf16>, vector<8x288xbf16>, vector<8x288xf32> -> vector<8x288xf32>
    %12 = arith.addf %6, %11 : vector<8x288xf32>
    %c0_14 = arith.constant 0 : index
    %c0_15 = arith.constant 0 : index
    %c0_16 = arith.constant 0 : index
    %c2 = arith.constant 2 : index
    %13 = vector.load %arg3[%c0_14, %c0_15, %c0_16, %c2] : memref<1x1x8x326xbf16, #tpu.memory_space<vmem>>, vector<1x1x8x288xbf16>
    %14 = vector.shape_cast %13 : vector<1x1x8x288xbf16> to vector<8x288xbf16>
    %c2_17 = arith.constant 2 : index
    %c0_18 = arith.constant 0 : index
    %c0_19 = arith.constant 0 : index
    %15 = vector.load %arg4[%c2_17, %c0_18, %c0_19] : memref<9x8x8xbf16, #tpu.memory_space<vmem>>, vector<1x8x8xbf16>
    %16 = vector.shape_cast %15 : vector<1x8x8xbf16> to vector<8x8xbf16>
    %cst_20 = arith.constant dense<0.000000e+00> : vector<8x288xf32>
    %17 = tpu.matmul %16, %14, %cst_20 {dimension_numbers = #tpu.dot_dimension_numbers<[1], [0], [0], [1], [0, 0, 1, 1], [], []>} : vector<8x8xbf16>, vector<8x288xbf16>, vector<8x288xf32> -> vector<8x288xf32>
    %18 = arith.addf %12, %17 : vector<8x288xf32>
    %c0_21 = arith.constant 0 : index
    %c0_22 = arith.constant 0 : index
    %c0_23 = arith.constant 0 : index
    %c18 = arith.constant 18 : index
    %19 = vector.load %arg3[%c0_21, %c0_22, %c0_23, %c18] : memref<1x1x8x326xbf16, #tpu.memory_space<vmem>>, vector<1x1x8x288xbf16>
    %20 = vector.shape_cast %19 : vector<1x1x8x288xbf16> to vector<8x288xbf16>
    %c3 = arith.constant 3 : index
    %c0_24 = arith.constant 0 : index
    %c0_25 = arith.constant 0 : index
    %21 = vector.load %arg4[%c3, %c0_24, %c0_25] : memref<9x8x8xbf16, #tpu.memory_space<vmem>>, vector<1x8x8xbf16>
    %22 = vector.shape_cast %21 : vector<1x8x8xbf16> to vector<8x8xbf16>
    %cst_26 = arith.constant dense<0.000000e+00> : vector<8x288xf32>
    %23 = tpu.matmul %22, %20, %cst_26 {dimension_numbers = #tpu.dot_dimension_numbers<[1], [0], [0], [1], [0, 0, 1, 1], [], []>} : vector<8x8xbf16>, vector<8x288xbf16>, vector<8x288xf32> -> vector<8x288xf32>
    %24 = arith.addf %18, %23 : vector<8x288xf32>
    %c0_27 = arith.constant 0 : index
    %c0_28 = arith.constant 0 : index
    %c0_29 = arith.constant 0 : index
    %c19 = arith.constant 19 : index
    %25 = vector.load %arg3[%c0_27, %c0_28, %c0_29, %c19] : memref<1x1x8x326xbf16, #tpu.memory_space<vmem>>, vector<1x1x8x288xbf16>
    %26 = vector.shape_cast %25 : vector<1x1x8x288xbf16> to vector<8x288xbf16>
    %c4 = arith.constant 4 : index
    %c0_30 = arith.constant 0 : index
    %c0_31 = arith.constant 0 : index
    %27 = vector.load %arg4[%c4, %c0_30, %c0_31] : memref<9x8x8xbf16, #tpu.memory_space<vmem>>, vector<1x8x8xbf16>
    %28 = vector.shape_cast %27 : vector<1x8x8xbf16> to vector<8x8xbf16>
    %cst_32 = arith.constant dense<0.000000e+00> : vector<8x288xf32>
    %29 = tpu.matmul %28, %26, %cst_32 {dimension_numbers = #tpu.dot_dimension_numbers<[1], [0], [0], [1], [0, 0, 1, 1], [], []>} : vector<8x8xbf16>, vector<8x288xbf16>, vector<8x288xf32> -> vector<8x288xf32>
    %30 = arith.addf %24, %29 : vector<8x288xf32>
    %c0_33 = arith.constant 0 : index
    %c0_34 = arith.constant 0 : index
    %c0_35 = arith.constant 0 : index
    %c20 = arith.constant 20 : index
    %31 = vector.load %arg3[%c0_33, %c0_34, %c0_35, %c20] : memref<1x1x8x326xbf16, #tpu.memory_space<vmem>>, vector<1x1x8x288xbf16>
    %32 = vector.shape_cast %31 : vector<1x1x8x288xbf16> to vector<8x288xbf16>
    %c5 = arith.constant 5 : index
    %c0_36 = arith.constant 0 : index
    %c0_37 = arith.constant 0 : index
    %33 = vector.load %arg4[%c5, %c0_36, %c0_37] : memref<9x8x8xbf16, #tpu.memory_space<vmem>>, vector<1x8x8xbf16>
    %34 = vector.shape_cast %33 : vector<1x8x8xbf16> to vector<8x8xbf16>
    %cst_38 = arith.constant dense<0.000000e+00> : vector<8x288xf32>
    %35 = tpu.matmul %34, %32, %cst_38 {dimension_numbers = #tpu.dot_dimension_numbers<[1], [0], [0], [1], [0, 0, 1, 1], [], []>} : vector<8x8xbf16>, vector<8x288xbf16>, vector<8x288xf32> -> vector<8x288xf32>
    %36 = arith.addf %30, %35 : vector<8x288xf32>
    %c0_39 = arith.constant 0 : index
    %c0_40 = arith.constant 0 : index
    %c0_41 = arith.constant 0 : index
    %c36 = arith.constant 36 : index
    %37 = vector.load %arg3[%c0_39, %c0_40, %c0_41, %c36] : memref<1x1x8x326xbf16, #tpu.memory_space<vmem>>, vector<1x1x8x288xbf16>
    %38 = vector.shape_cast %37 : vector<1x1x8x288xbf16> to vector<8x288xbf16>
    %c6 = arith.constant 6 : index
    %c0_42 = arith.constant 0 : index
    %c0_43 = arith.constant 0 : index
    %39 = vector.load %arg4[%c6, %c0_42, %c0_43] : memref<9x8x8xbf16, #tpu.memory_space<vmem>>, vector<1x8x8xbf16>
    %40 = vector.shape_cast %39 : vector<1x8x8xbf16> to vector<8x8xbf16>
    %cst_44 = arith.constant dense<0.000000e+00> : vector<8x288xf32>
    %41 = tpu.matmul %40, %38, %cst_44 {dimension_numbers = #tpu.dot_dimension_numbers<[1], [0], [0], [1], [0, 0, 1, 1], [], []>} : vector<8x8xbf16>, vector<8x288xbf16>, vector<8x288xf32> -> vector<8x288xf32>
    %42 = arith.addf %36, %41 : vector<8x288xf32>
    %c0_45 = arith.constant 0 : index
    %c0_46 = arith.constant 0 : index
    %c0_47 = arith.constant 0 : index
    %c37 = arith.constant 37 : index
    %43 = vector.load %arg3[%c0_45, %c0_46, %c0_47, %c37] : memref<1x1x8x326xbf16, #tpu.memory_space<vmem>>, vector<1x1x8x288xbf16>
    %44 = vector.shape_cast %43 : vector<1x1x8x288xbf16> to vector<8x288xbf16>
    %c7 = arith.constant 7 : index
    %c0_48 = arith.constant 0 : index
    %c0_49 = arith.constant 0 : index
    %45 = vector.load %arg4[%c7, %c0_48, %c0_49] : memref<9x8x8xbf16, #tpu.memory_space<vmem>>, vector<1x8x8xbf16>
    %46 = vector.shape_cast %45 : vector<1x8x8xbf16> to vector<8x8xbf16>
    %cst_50 = arith.constant dense<0.000000e+00> : vector<8x288xf32>
    %47 = tpu.matmul %46, %44, %cst_50 {dimension_numbers = #tpu.dot_dimension_numbers<[1], [0], [0], [1], [0, 0, 1, 1], [], []>} : vector<8x8xbf16>, vector<8x288xbf16>, vector<8x288xf32> -> vector<8x288xf32>
    %48 = arith.addf %42, %47 : vector<8x288xf32>
    %c0_51 = arith.constant 0 : index
    %c0_52 = arith.constant 0 : index
    %c0_53 = arith.constant 0 : index
    %c38 = arith.constant 38 : index
    %49 = vector.load %arg3[%c0_51, %c0_52, %c0_53, %c38] : memref<1x1x8x326xbf16, #tpu.memory_space<vmem>>, vector<1x1x8x288xbf16>
    %50 = vector.shape_cast %49 : vector<1x1x8x288xbf16> to vector<8x288xbf16>
    %c8 = arith.constant 8 : index
    %c0_54 = arith.constant 0 : index
    %c0_55 = arith.constant 0 : index
    %51 = vector.load %arg4[%c8, %c0_54, %c0_55] : memref<9x8x8xbf16, #tpu.memory_space<vmem>>, vector<1x8x8xbf16>
    %52 = vector.shape_cast %51 : vector<1x8x8xbf16> to vector<8x8xbf16>
    %cst_56 = arith.constant dense<0.000000e+00> : vector<8x288xf32>
    %53 = tpu.matmul %52, %50, %cst_56 {dimension_numbers = #tpu.dot_dimension_numbers<[1], [0], [0], [1], [0, 0, 1, 1], [], []>} : vector<8x8xbf16>, vector<8x288xbf16>, vector<8x288xf32> -> vector<8x288xf32>
    %54 = arith.addf %48, %53 : vector<8x288xf32>
    %c0_57 = arith.constant 0 : index
    %c0_58 = arith.constant 0 : index
    %55 = vector.load %arg5[%c0_57, %c0_58] : memref<8x1xf32, #tpu.memory_space<vmem>>, vector<8x1xf32>
    %56 = vector.broadcast %55 : vector<8x1xf32> to vector<8x288xf32>
    %57 = arith.addf %54, %56 : vector<8x288xf32>
    %58 = arith.negf %57 : vector<8x288xf32>
    %59 = math.exp %58 : vector<8x288xf32>
    %cst_59 = arith.constant 1.000000e+00 : f32
    %60 = vector.broadcast %cst_59 : f32 to vector<8x288xf32>
    %61 = arith.addf %60, %59 : vector<8x288xf32>
    %62 = arith.divf %60, %61 : vector<8x288xf32>
    %63 = arith.mulf %57, %62 : vector<8x288xf32>
    %c0_60 = arith.constant 0 : index
    %c0_61 = arith.constant 0 : index
    %c0_62 = arith.constant 0 : index
    %64 = vector.load %arg6[%c0_60, %c0_61, %c0_62] : memref<1x8x288xf32, #tpu.memory_space<vmem>>, vector<1x8x288xf32>
    %65 = vector.shape_cast %64 : vector<1x8x288xf32> to vector<8x288xf32>
    %66 = vector.shape_cast %63 : vector<8x288xf32> to vector<1x8x288xf32>
    tpu.vector_store %arg6[%c0_60, %c0_61, %c0_62], %66 {strides = array<i32>} : memref<1x8x288xf32, #tpu.memory_space<vmem>>, vector<1x8x288xf32>,
    return
  }
  func.func @transform_0(%arg0: i32, %arg1: i32, %arg2: i32) -> (i32, i32, i32, i32) {
    %c0_i32 = arith.constant 0 : i32
    %c0_i32_0 = arith.constant 0 : i32
    %c0_i32_1 = arith.constant 0 : i32
    return %arg0, %arg2, %c0_i32, %c0_i32_0 : i32, i32, i32, i32
  }
  func.func @transform_1(%arg0: i32, %arg1: i32, %arg2: i32) -> (i32, i32, i32) {
    %c0_i32 = arith.constant 0 : i32
    %c0_i32_0 = arith.constant 0 : i32
    %c0_i32_1 = arith.constant 0 : i32
    return %c0_i32, %arg1, %c0_i32_0 : i32, i32, i32
  }
  func.func @transform_2(%arg0: i32, %arg1: i32, %arg2: i32) -> (i32, i32) {
    %c0_i32 = arith.constant 0 : i32
    %c0_i32_0 = arith.constant 0 : i32
    return %arg1, %c0_i32 : i32, i32
  }
  func.func @transform_3(%arg0: i32, %arg1: i32, %arg2: i32) -> (i32, i32, i32) {
    %c0_i32 = arith.constant 0 : i32
    return %arg0, %arg1, %arg2 : i32, i32, i32
  }
}

</mosaic_0001>

<llo_original>
// kernel: conv_bn_act.1
$region0: #{conv_bn_act.1}
  #allocation0 [shape = 'u32[]', space=smem, size = 0x4, offset = 0x4, fixed_abs, tag = 'smem constant byte address 0x4 - core index']
  #allocation1 [shape = 'u32[144,128]{1,0:T(1,128)}', space=vmem, size = 0x12000, scoped, tag = 'internal scratch']
  %s0 = inlined_call_operand.vmem [shape: bf16[2,1,8,326], index: 0, kind: input, shape index: {}]
  %s1 = inlined_call_operand.vmem [shape: bf16[9,8,8], index: 1, kind: input, shape index: {}]
  %s2 = inlined_call_operand.vmem [shape: f32[8,1], index: 2, kind: input, shape index: {}]
  %s3 = inlined_call_operand.vmem [shape: f32[2,8,288], index: 3, kind: output, shape index: {}]
  %s4 = sld [smem:[#allocation0]]
  $region45: #{conv_bn_act.1} parent=0
    _
  %s6 = ssub.s32 1, %s4
  %s7 = scalar_select 0, %s6, %s4
  loop: start=0, step=1, limit=4
  $region2: #{conv_bn_act.1} parent=0 // loop_pre_header
    _
  $region3: #{conv_bn_act.1} parent=0 // loop_header
    %s9 = sphi 0, %s13
    %p10 = scmp.ge.s32.totalorder %s9, 4
    %s16 = sphi 0, %s35
    %s17 = sphi 0, %s31
    %s18 = sphi 0, %s27
    %s19 = sphi 0, %s16
    %s20 = sphi 0, %s17
    %s21 = sphi 0, %s18
    %s22 = sphi 0, %s19
    %s23 = sphi 0, %s20
    %s24 = sphi 0, %s21
    %s40 = sphi 0, %s42
    %s43 = sphi 0, %s40
    %s44 = sphi 0, %s43
    %s60 = sphi 0, %s44
    %s66 = sphi 0, %s68
    %s69 = sphi 0, %s66
    %s70 = sphi 0, %s69
    %s86 = sphi 0, %s70
    %s92 = sphi 0, %s94
    %s95 = sphi 0, %s92
    %s96 = sphi 0, %s95
    %s112 = sphi 0, %s96
    %s122 = sphi 0, %s124
    %s125 = sphi 0, %s122
    %s126 = sphi 0, %s125
    %s142 = sphi 0, %s126
  $region4: #{conv_bn_act.1} parent=0 // loop_header_branch
    %12 = sbr.rel (%p10) target = $region8
  $region5: #{conv_bn_act.1} parent=0 // loop_body
    %s14 = ssub.s32 %s9, 1
    %s15 = ssub.s32 %s9, 2
    %s25 = sadd.s32 1, %s18
    %p26 = scmp.ge.s32.totalorder %s25, 1
    %s27 = scalar_select %p26, 0, %s25
    %s28 = sadd.s32 1, %s17
    %s29 = scalar_select %p26, %s28, %s17
    %p30 = scmp.ge.s32.totalorder %s29, 1
    %s31 = scalar_select %p30, 0, %s29
    %s32 = sadd.s32 1, %s16
    %s33 = scalar_select %p30, %s32, %s16
    %p34 = scmp.ge.s32.totalorder %s33, 2
    %s35 = scalar_select %p34, 0, %s33
    %s36 = ssub.s32 %s16, %s35
    %s37 = ssub.s32 %s18, %s27
    %s38 = sor.u32 %s36, %s37
    %p39 = scmp.eq.s32.totalorder %s38, 0
    %s41 = sadd.s32 %s40, 1
    %s42 = scalar_select %p39, %s40, %s41
    %p45 = pneg %p39
    %p46 = scmp.eq.s32.totalorder %s9, 1
    %p47 = por %p45, %p46
    %p48 = scmp.ne.s32.totalorder %s40, %s43
    %p49 = scmp.eq.s32.totalorder %s9, 0
    %p50 = por %p48, %p49
    %p51 = scmp.ne.s32.totalorder %s40, %s43
    %p52 = scmp.eq.s32.totalorder %s14, 1
    %p53 = por %p51, %p52
    %p54 = scmp.ne.s32.totalorder %s43, %s44
    %p55 = scmp.eq.s32.totalorder %s14, 0
    %p56 = por %p54, %p55
    %p57 = scmp.ne.s32.totalorder %s43, %s44
    %p58 = scmp.eq.s32.totalorder %s15, 1
    %p59 = por %p57, %p58
    %p61 = scmp.ne.s32.totalorder %s44, %s60
    %p62 = scmp.eq.s32.totalorder %s15, 0
    %p63 = por %p61, %p62
    %s64 = ssub.s32 %s17, %s31
    %p65 = scmp.eq.s32.totalorder %s64, 0
    %s67 = sadd.s32 %s66, 1
    %s68 = scalar_select %p65, %s66, %s67
    %p71 = pneg %p65
    %p72 = scmp.eq.s32.totalorder %s9, 1
    %p73 = por %p71, %p72
    %p74 = scmp.ne.s32.totalorder %s66, %s69
    %p75 = scmp.eq.s32.totalorder %s9, 0
    %p76 = por %p74, %p75
    %p77 = scmp.ne.s32.totalorder %s66, %s69
    %p78 = scmp.eq.s32.totalorder %s14, 1
    %p79 = por %p77, %p78
    %p80 = scmp.ne.s32.totalorder %s69, %s70
    %p81 = scmp.eq.s32.totalorder %s14, 0
    %p82 = por %p80, %p81
    %p83 = scmp.ne.s32.totalorder %s69, %s70
    %p84 = scmp.eq.s32.totalorder %s15, 1
    %p85 = por %p83, %p84
    %p87 = scmp.ne.s32.totalorder %s70, %s86
    %p88 = scmp.eq.s32.totalorder %s15, 0
    %p89 = por %p87, %p88
    %s90 = ssub.s32 %s17, %s31
    %p91 = scmp.eq.s32.totalorder %s90, 0
    %s93 = sadd.s32 %s92, 1
    %s94 = scalar_select %p91, %s92, %s93
    %p97 = pneg %p91
    %p98 = scmp.eq.s32.totalorder %s9, 1
    %p99 = por %p97, %p98
    %p100 = scmp.ne.s32.totalorder %s92, %s95
    %p101 = scmp.eq.s32.totalorder %s9, 0
    %p102 = por %p100, %p101
    %p103 = scmp.ne.s32.totalorder %s92, %s95
    %p104 = scmp.eq.s32.totalorder %s14, 1
    %p105 = por %p103, %p104
    %p106 = scmp.ne.s32.totalorder %s95, %s96
    %p107 = scmp.eq.s32.totalorder %s14, 0
    %p108 = por %p106, %p107
    %p109 = scmp.ne.s32.totalorder %s95, %s96
    %p110 = scmp.eq.s32.totalorder %s15, 1
    %p111 = por %p109, %p110
    %p113 = scmp.ne.s32.totalorder %s96, %s112
    %p114 = scmp.eq.s32.totalorder %s15, 0
    %p115 = por %p113, %p114
    %s116 = ssub.s32 %s16, %s35
    %s117 = ssub.s32 %s17, %s31
    %s118 = sor.u32 %s116, %s117
    %s119 = ssub.s32 %s18, %s27
    %s120 = sor.u32 %s118, %s119
    %p121 = scmp.eq.s32.totalorder %s120, 0
    %s123 = sadd.s32 %s122, 1
    %s124 = scalar_select %p121, %s122, %s123
    %p127 = pneg %p121
    %p128 = scmp.eq.s32.totalorder %s9, 1
    %p129 = por %p127, %p128
    %p130 = scmp.ne.s32.totalorder %s122, %s125
    %p131 = scmp.eq.s32.totalorder %s9, 0
    %p132 = por %p130, %p131
    %p133 = scmp.ne.s32.totalorder %s122, %s125
    %p134 = scmp.eq.s32.totalorder %s14, 1
    %p135 = por %p133, %p134
    %p136 = scmp.ne.s32.totalorder %s125, %s126
    %p137 = scmp.eq.s32.totalorder %s14, 0
    %p138 = por %p136, %p137
    %p139 = scmp.ne.s32.totalorder %s125, %s126
    %p140 = scmp.eq.s32.totalorder %s15, 1
    %p141 = por %p139, %p140
    %p143 = scmp.ne.s32.totalorder %s126, %s142
    %p144 = scmp.eq.s32.totalorder %s15, 0
    %p145 = por %p143, %p144
    %p146 = scmp.le.s32.totalorder 1, %s9
    %p147 = scmp.lt.s32.totalorder %s9, 3
    %p148 = pnand %p146, %p147
    %p149 = pneg %p148
    // Predicated region
    $region9: #{conv_bn_act.1} parent=5 // pred_check
      _
    $region10: #{conv_bn_act.1} parent=5 // pred_check_branch
      %151 = sbr.rel (%p148) target = $region12
    $region11: #{conv_bn_act.1} parent=5 // pred_region
      %s152 = ssub.s32 %s9, 1
      // Predicated region
      $region13: #{conv_bn_act.1} parent=11 // pred_check
        %p153 = pneg %p82
      $region14: #{conv_bn_act.1} parent=11 // pred_check_branch
        %155 = sbr.rel (%p153) target = $region16
      $region15: #{conv_bn_act.1} parent=11 // pred_region
        %p156 = scmp.lt.s32.totalorder %s20, 0
        %s157 = scalar_select %p156, %s20, 0
        %s158 = smul.addr %s157, 4
        %s159 = scalar_lea.vmem %s1, %s158
      $region16: #{conv_bn_act.1} parent=11 // pred_fallthru
        _
      // Predicated region
      $region17: #{conv_bn_act.1} parent=11 // pred_check
        %p160 = pneg %p108
      $region18: #{conv_bn_act.1} parent=11 // pred_check_branch
        %162 = sbr.rel (%p160) target = $region20
      $region19: #{conv_bn_act.1} parent=11 // pred_region
        %p163 = scmp.lt.s32.totalorder %s20, 0
        %s164 = scalar_select %p163, %s20, 0
        %s165 = smul.addr %s164, 8
        %s166 = scalar_lea.vmem %s2, %s165
      $region20: #{conv_bn_act.1} parent=11 // pred_fallthru
        _
    $region12: #{conv_bn_act.1} parent=5 // pred_fallthru
      _
    %p167 = scmp.lt.s32.totalorder %s9, 2
    // Predicated region
    $region21: #{conv_bn_act.1} parent=5 // pred_check
      %p168 = pneg %p167
    $region22: #{conv_bn_act.1} parent=5 // pred_check_branch
      %170 = sbr.rel (%p168) target = $region24
    $region23: #{conv_bn_act.1} parent=5 // pred_region
      // Predicated region
      $region25: #{conv_bn_act.1} parent=23 // pred_check
        %p171 = pneg %p50
      $region26: #{conv_bn_act.1} parent=23 // pred_check_branch
        %173 = sbr.rel (%p171) target = $region28
      $region27: #{conv_bn_act.1} parent=23 // pred_region
        %p174 = scmp.lt.s32.totalorder %s16, 1
        %s175 = scalar_select %p174, %s16, 1
        %p176 = scmp.lt.s32.totalorder %s18, 0
        %s177 = scalar_select %p176, %s18, 0
        %s178 = smul.addr %s177, 3
        %s179 = smul.addr %s175, 3
        %s180 = sadd.s32 %s178, %s179
        %s181 = smul.addr %s180, 4
        %s182 = scalar_lea.vmem %s0, %s181
      $region28: #{conv_bn_act.1} parent=23 // pred_fallthru
        _
    $region24: #{conv_bn_act.1} parent=5 // pred_fallthru
      _
    %p183 = scmp.le.s32.totalorder 1, %s9
    %p184 = scmp.lt.s32.totalorder %s9, 3
    %p185 = pnand %p183, %p184
    %p186 = pneg %p185
    // Predicated region
    $region29: #{conv_bn_act.1} parent=5 // pred_check
      _
    $region30: #{conv_bn_act.1} parent=5 // pred_check_branch
      %188 = sbr.rel (%p185) target = $region32
    $region31: #{conv_bn_act.1} parent=5 // pred_region
      %s189 = ssub.s32 %s9, 1
      %p190 = scmp.lt.s32.totalorder %s19, 1
      %s191 = scalar_select %p190, %s19, 1
      %p192 = scmp.lt.s32.totalorder %s21, 0
      %s193 = scalar_select %p192, %s21, 0
      %s194 = smul.addr %s193, 3
      %s195 = smul.addr %s191, 3
      %s196 = sadd.s32 %s194, %s195
      %s197 = smul.addr %s196, 4
      %s198 = scalar_lea.vmem %s0, %s197
      %p199 = pneg %p56
      %p200 = pneg %p53
      %p201 = scmp.lt.s32.totalorder %s20, 0
      %s202 = scalar_select %p201, %s20, 0
      %s203 = smul.addr %s202, 4
      %s204 = scalar_lea.vmem %s1, %s203
      %p205 = pneg %p82
      %p206 = pneg %p79
      %p207 = scmp.lt.s32.totalorder %s20, 0
      %s208 = scalar_select %p207, %s20, 0
      %s209 = smul.addr %s208, 8
      %s210 = scalar_lea.vmem %s2, %s209
      %p211 = pneg %p108
      %p212 = pneg %p105
      %p213 = pneg %p138
      %p214 = pneg %p135
      %s215 = smul.u32 3, %s21
      %p216 = scmp.lt.s32.totalorder %s19, 1
      %s217 = scalar_select %p216, %s19, 1
      %p218 = scmp.lt.s32.totalorder %s20, 0
      %s219 = scalar_select %p218, %s20, 0
      %p220 = scmp.lt.s32.totalorder %s215, 2
      %s221 = scalar_select %p220, %s215, 2
      %s222 = smul.addr %s219, 3
      %s223 = sadd.s32 %s221, %s222
      %s224 = smul.addr %s217, 3
      %s225 = sadd.s32 %s223, %s224
      %s226 = smul.addr %s225, 8
      %s227 = scalar_lea.vmem %s3, %s226
      %p228 = scmp.lt.s32.totalorder %s19, 1
      %s229 = scalar_select %p228, %s19, 1
      %p230 = scmp.lt.s32.totalorder %s21, 0
      %s231 = scalar_select %p230, %s21, 0
      %s232 = smul.addr %s231, 3
      %s233 = smul.addr %s229, 3
      %s234 = sadd.s32 %s232, %s233
      %s235 = smul.addr %s234, 4
      %s236 = scalar_lea.vmem %s0, %s235
      %p237 = scmp.lt.s32.totalorder %s20, 0
      %s238 = scalar_select %p237, %s20, 0
      %s239 = smul.addr %s238, 4
      %s240 = scalar_lea.vmem %s1, %s239
      %p241 = scmp.lt.s32.totalorder %s20, 0
      %s242 = scalar_select %p241, %s20, 0
      %s243 = smul.addr %s242, 8
      %s244 = scalar_lea.vmem %s2, %s243
      %s245 = smul.u32 3, %s21
      %p246 = scmp.lt.s32.totalorder %s19, 1
      %s247 = scalar_select %p246, %s19, 1
      %p248 = scmp.lt.s32.totalorder %s20, 0
      %s249 = scalar_select %p248, %s20, 0
      %p250 = scmp.lt.s32.totalorder %s245, 2
      %s251 = scalar_select %p250, %s245, 2
      %s252 = smul.addr %s249, 3
      %s253 = sadd.s32 %s251, %s252
      %s254 = smul.addr %s247, 3
      %s255 = sadd.s32 %s253, %s254
      %s256 = smul.addr %s255, 8
      %s257 = scalar_lea.vmem %s3, %s256
      %s258 = smul.u32 3, %s21
      %v260 = vld [vmem:[%s236] sm:$0xff]
      %v261 = vld [vmem:[%s236 + $0x8] sm:$0xf]
      %v262 = vld [vmem:[%s240] sm:$0xf]
      %s263 = scalar_lea.vmem %s240, 4
      %v264 = vld [vmem:[%s263] sm:$0xf]
      %v267 = vunpack.c.l.b16 %v260
      %v268 = vunpack.c.h.b16 %v260
      %v269 = vunpack.c.l.b16 %v261
      %v270 = vpack.c.b16 %v267, %v267
      %v271 = vpack.c.b16 %v268, %v268
      %v272 = vpack.c.b16 %v269, %v269
      %273 = vrot.lane.b32.xlu0 %v270, 127
      %v274 = vpop.permute.xlu0 %273
      %275 = vrot.lane.b32.xlu0 %v271, 127
      %v276 = vpop.permute.xlu0 %275
      %277 = vrot.lane.b32.xlu0 %v272, 127
      %v278 = vpop.permute.xlu0 %277
      %vm279 = vcmask 1039360
      %v280 = vsel %vm279, %v274, %v276
      %v281 = vsel %vm279, %v276, %v278
      %vm282 = vcmask 64512
      %v284 = vsel %vm282, %v264, 0
      %vm286 = vcmask 1043456
      %v288 = vsel %vm286, %v280, 0
      %v291 = vsel %vm286, %v281, 0
      %v294 = vsel %vm286, %v278, 0
      %296 = vmatprep.subr.bf16.mxu0 %v291
      %297 = vmatpush1.bf16.msra.mxu0 %v288
      %298 = vmatprep.subr.bf16.mxu0 0
      %299 = vmatpush1.bf16.msra.mxu0 0
      %300 = vmatprep.subr.bf16.mxu0 0
      %301 = vmatpush1.bf16.msra.mxu0 0
      %302 = vmatprep.subr.bf16.mxu0 0
      %303 = vmatpush1.bf16.msra.mxu0 0
      %304 = vmatprep.subr.bf16.mxu0 0
      %305 = vmatpush1.bf16.msra.mxu0 0
      %306 = vmatprep.subr.bf16.mxu0 0
      %307 = vmatpush1.bf16.msra.mxu0 0
      %308 = vmatprep.subr.bf16.mxu0 0
      %309 = vmatpush1.bf16.msra.mxu0 0
      %310 = vmatprep.subr.bf16.mxu0 0
      %311 = vmatpush1.bf16.msra.mxu0 0
      %312 = vmatprep.subr.bf16.mxu0 0
      %313 = vmatpush1.bf16.msra.mxu0 0
      %314 = vmatprep.subr.bf16.mxu0 0
      %315 = vmatpush1.bf16.msra.mxu0 0
      %316 = vmatprep.subr.bf16.mxu0 0
      %317 = vmatpush1.bf16.msra.mxu0 0
      %318 = vmatprep.subr.bf16.mxu0 0
      %319 = vmatpush1.bf16.msra.mxu0 0
      %320 = vmatprep.subr.bf16.mxu0 0
      %321 = vmatpush1.bf16.msra.mxu0 0
      %322 = vmatprep.subr.bf16.mxu0 0
      %323 = vmatpush1.bf16.msra.mxu0 0
      %324 = vmatprep.subr.bf16.mxu0 0
      %325 = vmatpush1.bf16.msra.mxu0 0
      %326 = vmatprep.subr.bf16.mxu0 0
      %327 = vmatpush1.bf16.msra.mxu0 0
      %328 = vmatprep.mubr.bf16.mxu0 0
      %329 = vmatmul.mubr.bf16.gmra.mrb[0].mxu0 %v284
      %v330 = vpop.f32.mrb[0].mxu0
      %v331 = vadd.f32 0.0, %v330
      %v332 = vpop.f32.mrb[0].mxu0
      %v333 = vadd.f32 0.0, %v332
      %v334 = vpop.f32.mrb[0].mxu0
      %v335 = vpop.f32.mrb[0].mxu0
      %336 = vdwg.mxu0
      %337 = vmatprep.subr.bf16.mxu0 0
      %338 = vmatpush1.bf16.msra.mxu0 %v294
      %339 = vmatprep.subr.bf16.mxu0 0
      %340 = vmatpush1.bf16.msra.mxu0 0
      %341 = vmatprep.subr.bf16.mxu0 0
      %342 = vmatpush1.bf16.msra.mxu0 0
      %343 = vmatprep.subr.bf16.mxu0 0
      %344 = vmatpush1.bf16.msra.mxu0 0
      %345 = vmatprep.subr.bf16.mxu0 0
      %346 = vmatpush1.bf16.msra.mxu0 0
      %347 = vmatprep.subr.bf16.mxu0 0
      %348 = vmatpush1.bf16.msra.mxu0 0
      %349 = vmatprep.subr.bf16.mxu0 0
      %350 = vmatpush1.bf16.msra.mxu0 0
      %351 = vmatprep.subr.bf16.mxu0 0
      %352 = vmatpush1.bf16.msra.mxu0 0
      %353 = vmatprep.subr.bf16.mxu0 0
      %354 = vmatpush1.bf16.msra.mxu0 0
      %355 = vmatprep.subr.bf16.mxu0 0
      %356 = vmatpush1.bf16.msra.mxu0 0
      %357 = vmatprep.subr.bf16.mxu0 0
      %358 = vmatpush1.bf16.msra.mxu0 0
      %359 = vmatprep.subr.bf16.mxu0 0
      %360 = vmatpush1.bf16.msra.mxu0 0
      %361 = vmatprep.subr.bf16.mxu0 0
      %362 = vmatpush1.bf16.msra.mxu0 0
      %363 = vmatprep.subr.bf16.mxu0 0
      %364 = vmatpush1.bf16.msra.mxu0 0
      %365 = vmatprep.subr.bf16.mxu0 0
      %366 = vmatpush1.bf16.msra.mxu0 0
      %367 = vmatprep.subr.bf16.mxu0 0
      %368 = vmatpush1.bf16.msra.mxu0 0
      %369 = vmatprep.mubr.bf16.mxu0 0
      %370 = vmatmul.mubr.bf16.gmra.mrb[0].mxu0 %v284
      %v371 = vpop.f32.mrb[0].mxu0
      %v372 = vadd.f32 0.0, %v371
      %v373 = vpop.f32.mrb[0].mxu0
      %v374 = vpop.f32.mrb[0].mxu0
      %v375 = vpop.f32.mrb[0].mxu0
      %376 = vdwg.mxu0
      %v378 = vsel %vm282, %v262, 0
      %v381 = vsel %vm286, %v270, 0
      %v384 = vsel %vm286, %v271, 0
      %v387 = vsel %vm286, %v272, 0
      %389 = vmatprep.subr.bf16.mxu0 %v384
      %390 = vmatpush1.bf16.msra.mxu0 %v381
      %391 = vmatprep.subr.bf16.mxu0 0
      %392 = vmatpush1.bf16.msra.mxu0 0
      %393 = vmatprep.subr.bf16.mxu0 0
      %394 = vmatpush1.bf16.msra.mxu0 0
      %395 = vmatprep.subr.bf16.mxu0 0
      %396 = vmatpush1.bf16.msra.mxu0 0
      %397 = vmatprep.subr.bf16.mxu0 0
      %398 = vmatpush1.bf16.msra.mxu0 0
      %399 = vmatprep.subr.bf16.mxu0 0
      %400 = vmatpush1.bf16.msra.mxu0 0
      %401 = vmatprep.subr.bf16.mxu0 0
      %402 = vmatpush1.bf16.msra.mxu0 0
      %403 = vmatprep.subr.bf16.mxu0 0
      %404 = vmatpush1.bf16.msra.mxu0 0
      %405 = vmatprep.subr.bf16.mxu0 0
      %406 = vmatpush1.bf16.msra.mxu0 0
      %407 = vmatprep.subr.bf16.mxu0 0
      %408 = vmatpush1.bf16.msra.mxu0 0
      %409 = vmatprep.subr.bf16.mxu0 0
      %410 = vmatpush1.bf16.msra.mxu0 0
      %411 = vmatprep.subr.bf16.mxu0 0
      %412 = vmatpush1.bf16.msra.mxu0 0
      %413 = vmatprep.subr.bf16.mxu0 0
      %414 = vmatpush1.bf16.msra.mxu0 0
      %415 = vmatprep.subr.bf16.mxu0 0
      %416 = vmatpush1.bf16.msra.mxu0 0
      %417 = vmatprep.subr.bf16.mxu0 0
      %418 = vmatpush1.bf16.msra.mxu0 0
      %419 = vmatprep.subr.bf16.mxu0 0
      %420 = vmatpush1.bf16.msra.mxu0 0
      %421 = vmatprep.mubr.bf16.mxu0 0
      %422 = vmatmul.mubr.bf16.gmra.mrb[0].mxu0 %v378
      %v423 = vpop.f32.mrb[0].mxu0
      %v424 = vadd.f32 %v331, %v423
      %v425 = vpop.f32.mrb[0].mxu0
      %v426 = vadd.f32 %v333, %v425
      %v427 = vpop.f32.mrb[0].mxu0
      %v428 = vpop.f32.mrb[0].mxu0
      %429 = vdwg.mxu0
      %430 = vmatprep.subr.bf16.mxu0 0
      %431 = vmatpush1.bf16.msra.mxu0 %v387
      %432 = vmatprep.subr.bf16.mxu0 0
      %433 = vmatpush1.bf16.msra.mxu0 0
      %434 = vmatprep.subr.bf16.mxu0 0
      %435 = vmatpush1.bf16.msra.mxu0 0
      %436 = vmatprep.subr.bf16.mxu0 0
      %437 = vmatpush1.bf16.msra.mxu0 0
      %438 = vmatprep.subr.bf16.mxu0 0
      %439 = vmatpush1.bf16.msra.mxu0 0
      %440 = vmatprep.subr.bf16.mxu0 0
      %441 = vmatpush1.bf16.msra.mxu0 0
      %442 = vmatprep.subr.bf16.mxu0 0
      %443 = vmatpush1.bf16.msra.mxu0 0
      %444 = vmatprep.subr.bf16.mxu0 0
      %445 = vmatpush1.bf16.msra.mxu0 0
      %446 = vmatprep.subr.bf16.mxu0 0
      %447 = vmatpush1.bf16.msra.mxu0 0
      %448 = vmatprep.subr.bf16.mxu0 0
      %449 = vmatpush1.bf16.msra.mxu0 0
      %450 = vmatprep.subr.bf16.mxu0 0
      %451 = vmatpush1.bf16.msra.mxu0 0
      %452 = vmatprep.subr.bf16.mxu0 0
      %453 = vmatpush1.bf16.msra.mxu0 0
      %454 = vmatprep.subr.bf16.mxu0 0
      %455 = vmatpush1.bf16.msra.mxu0 0
      %456 = vmatprep.subr.bf16.mxu0 0
      %457 = vmatpush1.bf16.msra.mxu0 0
      %458 = vmatprep.subr.bf16.mxu0 0
      %459 = vmatpush1.bf16.msra.mxu0 0
      %460 = vmatprep.subr.bf16.mxu0 0
      %461 = vmatpush1.bf16.msra.mxu0 0
      %462 = vmatprep.mubr.bf16.mxu0 0
      %463 = vmatmul.mubr.bf16.gmra.mrb[0].mxu0 %v378
      %v464 = vpop.f32.mrb[0].mxu0
      %v465 = vadd.f32 %v372, %v464
      %v466 = vpop.f32.mrb[0].mxu0
      %v467 = vpop.f32.mrb[0].mxu0
      %v468 = vpop.f32.mrb[0].mxu0
      %469 = vdwg.mxu0
      %s470 = scalar_lea.vmem %s240, 8
      %v471 = vld [vmem:[%s470] sm:$0xf]
      %472 = vrot.lane.b32.xlu0 %v270, 126
      %v473 = vpop.permute.xlu0 %472
      %474 = vrot.lane.b32.xlu0 %v271, 126
      %v475 = vpop.permute.xlu0 %474
      %476 = vrot.lane.b32.xlu0 %v272, 126
      %v477 = vpop.permute.xlu0 %476
      %vm478 = vcmask 1031168
      %v479 = vsel %vm478, %v473, %v475
      %v480 = vsel %vm478, %v475, %v477
      %v482 = vsel %vm282, %v471, 0
      %v485 = vsel %vm286, %v479, 0
      %v488 = vsel %vm286, %v480, 0
      %v491 = vsel %vm286, %v477, 0
      %493 = vmatprep.subr.bf16.mxu0 %v488
      %494 = vmatpush1.bf16.msra.mxu0 %v485
      %495 = vmatprep.subr.bf16.mxu0 0
      %496 = vmatpush1.bf16.msra.mxu0 0
      %497 = vmatprep.subr.bf16.mxu0 0
      %498 = vmatpush1.bf16.msra.mxu0 0
      %499 = vmatprep.subr.bf16.mxu0 0
      %500 = vmatpush1.bf16.msra.mxu0 0
      %501 = vmatprep.subr.bf16.mxu0 0
      %502 = vmatpush1.bf16.msra.mxu0 0
      %503 = vmatprep.subr.bf16.mxu0 0
      %504 = vmatpush1.bf16.msra.mxu0 0
      %505 = vmatprep.subr.bf16.mxu0 0
      %506 = vmatpush1.bf16.msra.mxu0 0
      %507 = vmatprep.subr.bf16.mxu0 0
      %508 = vmatpush1.bf16.msra.mxu0 0
      %509 = vmatprep.subr.bf16.mxu0 0
      %510 = vmatpush1.bf16.msra.mxu0 0
      %511 = vmatprep.subr.bf16.mxu0 0
      %512 = vmatpush1.bf16.msra.mxu0 0
      %513 = vmatprep.subr.bf16.mxu0 0
      %514 = vmatpush1.bf16.msra.mxu0 0
      %515 = vmatprep.subr.bf16.mxu0 0
      %516 = vmatpush1.bf16.msra.mxu0 0
      %517 = vmatprep.subr.bf16.mxu0 0
      %518 = vmatpush1.bf16.msra.mxu0 0
      %519 = vmatprep.subr.bf16.mxu0 0
      %520 = vmatpush1.bf16.msra.mxu0 0
      %521 = vmatprep.subr.bf16.mxu0 0
      %522 = vmatpush1.bf16.msra.mxu0 0
      %523 = vmatprep.subr.bf16.mxu0 0
      %524 = vmatpush1.bf16.msra.mxu0 0
      %525 = vmatprep.mubr.bf16.mxu0 0
      %526 = vmatmul.mubr.bf16.gmra.mrb[0].mxu0 %v482
      %v527 = vpop.f32.mrb[0].mxu0
      %v528 = vadd.f32 0.0, %v527
      %v529 = vpop.f32.mrb[0].mxu0
      %v530 = vadd.f32 0.0, %v529
      %v531 = vpop.f32.mrb[0].mxu0
      %v532 = vpop.f32.mrb[0].mxu0
      %533 = vdwg.mxu0
      %534 = vmatprep.subr.bf16.mxu0 0
      %535 = vmatpush1.bf16.msra.mxu0 %v491
      %536 = vmatprep.subr.bf16.mxu0 0
      %537 = vmatpush1.bf16.msra.mxu0 0
      %538 = vmatprep.subr.bf16.mxu0 0
      %539 = vmatpush1.bf16.msra.mxu0 0
      %540 = vmatprep.subr.bf16.mxu0 0
      %541 = vmatpush1.bf16.msra.mxu0 0
      %542 = vmatprep.subr.bf16.mxu0 0
      %543 = vmatpush1.bf16.msra.mxu0 0
      %544 = vmatprep.subr.bf16.mxu0 0
      %545 = vmatpush1.bf16.msra.mxu0 0
      %546 = vmatprep.subr.bf16.mxu0 0
      %547 = vmatpush1.bf16.msra.mxu0 0
      %548 = vmatprep.subr.bf16.mxu0 0
      %549 = vmatpush1.bf16.msra.mxu0 0
      %550 = vmatprep.subr.bf16.mxu0 0
      %551 = vmatpush1.bf16.msra.mxu0 0
      %552 = vmatprep.subr.bf16.mxu0 0
      %553 = vmatpush1.bf16.msra.mxu0 0
      %554 = vmatprep.subr.bf16.mxu0 0
      %555 = vmatpush1.bf16.msra.mxu0 0
      %556 = vmatprep.subr.bf16.mxu0 0
      %557 = vmatpush1.bf16.msra.mxu0 0
      %558 = vmatprep.subr.bf16.mxu0 0
      %559 = vmatpush1.bf16.msra.mxu0 0
      %560 = vmatprep.subr.bf16.mxu0 0
      %561 = vmatpush1.bf16.msra.mxu0 0
      %562 = vmatprep.subr.bf16.mxu0 0
      %563 = vmatpush1.bf16.msra.mxu0 0
      %564 = vmatprep.subr.bf16.mxu0 0
      %565 = vmatpush1.bf16.msra.mxu0 0
      %566 = vmatprep.mubr.bf16.mxu0 0
      %567 = vmatmul.mubr.bf16.gmra.mrb[0].mxu0 %v482
      %v568 = vpop.f32.mrb[0].mxu0
      %v569 = vadd.f32 0.0, %v568
      %v570 = vpop.f32.mrb[0].mxu0
      %v571 = vpop.f32.mrb[0].mxu0
      %v572 = vpop.f32.mrb[0].mxu0
      %573 = vdwg.mxu0
      %v574 = vadd.f32 %v424, %v528
      %v575 = vadd.f32 %v426, %v530
      %v576 = vadd.f32 %v465, %v569
      %s577 = scalar_lea.vmem %s240, 12
      %v578 = vld [vmem:[%s577] sm:$0xf]
      %579 = vrot.lane.b32.xlu0 %v270, 110
      %v580 = vpop.permute.xlu0 %579
      %581 = vrot.lane.b32.xlu0 %v271, 110
      %v582 = vpop.permute.xlu0 %581
      %583 = vrot.lane.b32.xlu0 %v272, 110
      %v584 = vpop.permute.xlu0 %583
      %vm585 = vcmask 900096
      %v586 = vsel %vm585, %v580, %v582
      %v587 = vsel %vm585, %v582, %v584
      %v589 = vsel %vm282, %v578, 0
      %v592 = vsel %vm286, %v586, 0
      %v595 = vsel %vm286, %v587, 0
      %v598 = vsel %vm286, %v584, 0
      %600 = vmatprep.subr.bf16.mxu0 %v595
      %601 = vmatpush1.bf16.msra.mxu0 %v592
      %602 = vmatprep.subr.bf16.mxu0 0
      %603 = vmatpush1.bf16.msra.mxu0 0
      %604 = vmatprep.subr.bf16.mxu0 0
      %605 = vmatpush1.bf16.msra.mxu0 0
      %606 = vmatprep.subr.bf16.mxu0 0
      %607 = vmatpush1.bf16.msra.mxu0 0
      %608 = vmatprep.subr.bf16.mxu0 0
      %609 = vmatpush1.bf16.msra.mxu0 0
      %610 = vmatprep.subr.bf16.mxu0 0
      %611 = vmatpush1.bf16.msra.mxu0 0
      %612 = vmatprep.subr.bf16.mxu0 0
      %613 = vmatpush1.bf16.msra.mxu0 0
      %614 = vmatprep.subr.bf16.mxu0 0
      %615 = vmatpush1.bf16.msra.mxu0 0
      %616 = vmatprep.subr.bf16.mxu0 0
      %617 = vmatpush1.bf16.msra.mxu0 0
      %618 = vmatprep.subr.bf16.mxu0 0
      %619 = vmatpush1.bf16.msra.mxu0 0
      %620 = vmatprep.subr.bf16.mxu0 0
      %621 = vmatpush1.bf16.msra.mxu0 0
      %622 = vmatprep.subr.bf16.mxu0 0
      %623 = vmatpush1.bf16.msra.mxu0 0
      %624 = vmatprep.subr.bf16.mxu0 0
      %625 = vmatpush1.bf16.msra.mxu0 0
      %626 = vmatprep.subr.bf16.mxu0 0
      %627 = vmatpush1.bf16.msra.mxu0 0
      %628 = vmatprep.subr.bf16.mxu0 0
      %629 = vmatpush1.bf16.msra.mxu0 0
      %630 = vmatprep.subr.bf16.mxu0 0
      %631 = vmatpush1.bf16.msra.mxu0 0
      %632 = vmatprep.mubr.bf16.mxu0 0
      %633 = vmatmul.mubr.bf16.gmra.mrb[0].mxu0 %v589
      %v634 = vpop.f32.mrb[0].mxu0
      %v635 = vadd.f32 0.0, %v634
      %v636 = vpop.f32.mrb[0].mxu0
      %v637 = vadd.f32 0.0, %v636
      %v638 = vpop.f32.mrb[0].mxu0
      %v639 = vpop.f32.mrb[0].mxu0
      %640 = vdwg.mxu0
      %641 = vmatprep.subr.bf16.mxu0 0
      %642 = vmatpush1.bf16.msra.mxu0 %v598
      %643 = vmatprep.subr.bf16.mxu0 0
      %644 = vmatpush1.bf16.msra.mxu0 0
      %645 = vmatprep.subr.bf16.mxu0 0
      %646 = vmatpush1.bf16.msra.mxu0 0
      %647 = vmatprep.subr.bf16.mxu0 0
      %648 = vmatpush1.bf16.msra.mxu0 0
      %649 = vmatprep.subr.bf16.mxu0 0
      %650 = vmatpush1.bf16.msra.mxu0 0
      %651 = vmatprep.subr.bf16.mxu0 0
      %652 = vmatpush1.bf16.msra.mxu0 0
      %653 = vmatprep.subr.bf16.mxu0 0
      %654 = vmatpush1.bf16.msra.mxu0 0
      %655 = vmatprep.subr.bf16.mxu0 0
      %656 = vmatpush1.bf16.msra.mxu0 0
      %657 = vmatprep.subr.bf16.mxu0 0
      %658 = vmatpush1.bf16.msra.mxu0 0
      %659 = vmatprep.subr.bf16.mxu0 0
      %660 = vmatpush1.bf16.msra.mxu0 0
      %661 = vmatprep.subr.bf16.mxu0 0
      %662 = vmatpush1.bf16.msra.mxu0 0
      %663 = vmatprep.subr.bf16.mxu0 0
      %664 = vmatpush1.bf16.msra.mxu0 0
      %665 = vmatprep.subr.bf16.mxu0 0
      %666 = vmatpush1.bf16.msra.mxu0 0
      %667 = vmatprep.subr.bf16.mxu0 0
      %668 = vmatpush1.bf16.msra.mxu0 0
      %669 = vmatprep.subr.bf16.mxu0 0
      %670 = vmatpush1.bf16.msra.mxu0 0
      %671 = vmatprep.subr.bf16.mxu0 0
      %672 = vmatpush1.bf16.msra.mxu0 0
      %673 = vmatprep.mubr.bf16.mxu0 0
      %674 = vmatmul.mubr.bf16.gmra.mrb[0].mxu0 %v589
      %v675 = vpop.f32.mrb[0].mxu0
      %v676 = vadd.f32 0.0, %v675
      %v677 = vpop.f32.mrb[0].mxu0
      %v678 = vpop.f32.mrb[0].mxu0
      %v679 = vpop.f32.mrb[0].mxu0
      %680 = vdwg.mxu0
      %v681 = vadd.f32 %v574, %v635
      %v682 = vadd.f32 %v575, %v637
      %v683 = vadd.f32 %v576, %v676
      %s684 = scalar_lea.vmem %s240, 16
      %v685 = vld [vmem:[%s684] sm:$0xf]
      %686 = vrot.lane.b32.xlu0 %v270, 109
      %v687 = vpop.permute.xlu0 %686
      %688 = vrot.lane.b32.xlu0 %v271, 109
      %v689 = vpop.permute.xlu0 %688
      %690 = vrot.lane.b32.xlu0 %v272, 109
      %v691 = vpop.permute.xlu0 %690
      %vm692 = vcmask 891904
      %v693 = vsel %vm692, %v687, %v689
      %v694 = vsel %vm692, %v689, %v691
      %v696 = vsel %vm282, %v685, 0
      %v699 = vsel %vm286, %v693, 0
      %v702 = vsel %vm286, %v694, 0
      %v705 = vsel %vm286, %v691, 0
      %707 = vmatprep.subr.bf16.mxu0 %v702
      %708 = vmatpush1.bf16.msra.mxu0 %v699
      %709 = vmatprep.subr.bf16.mxu0 0
      %710 = vmatpush1.bf16.msra.mxu0 0
      %711 = vmatprep.subr.bf16.mxu0 0
      %712 = vmatpush1.bf16.msra.mxu0 0
      %713 = vmatprep.subr.bf16.mxu0 0
      %714 = vmatpush1.bf16.msra.mxu0 0
      %715 = vmatprep.subr.bf16.mxu0 0
      %716 = vmatpush1.bf16.msra.mxu0 0
      %717 = vmatprep.subr.bf16.mxu0 0
      %718 = vmatpush1.bf16.msra.mxu0 0
      %719 = vmatprep.subr.bf16.mxu0 0
      %720 = vmatpush1.bf16.msra.mxu0 0
      %721 = vmatprep.subr.bf16.mxu0 0
      %722 = vmatpush1.bf16.msra.mxu0 0
      %723 = vmatprep.subr.bf16.mxu0 0
      %724 = vmatpush1.bf16.msra.mxu0 0
      %725 = vmatprep.subr.bf16.mxu0 0
      %726 = vmatpush1.bf16.msra.mxu0 0
      %727 = vmatprep.subr.bf16.mxu0 0
      %728 = vmatpush1.bf16.msra.mxu0 0
      %729 = vmatprep.subr.bf16.mxu0 0
      %730 = vmatpush1.bf16.msra.mxu0 0
      %731 = vmatprep.subr.bf16.mxu0 0
      %732 = vmatpush1.bf16.msra.mxu0 0
      %733 = vmatprep.subr.bf16.mxu0 0
      %734 = vmatpush1.bf16.msra.mxu0 0
      %735 = vmatprep.subr.bf16.mxu0 0
      %736 = vmatpush1.bf16.msra.mxu0 0
      %737 = vmatprep.subr.bf16.mxu0 0
      %738 = vmatpush1.bf16.msra.mxu0 0
      %739 = vmatprep.mubr.bf16.mxu0 0
      %740 = vmatmul.mubr.bf16.gmra.mrb[0].mxu0 %v696
      %v741 = vpop.f32.mrb[0].mxu0
      %v742 = vadd.f32 0.0, %v741
      %v743 = vpop.f32.mrb[0].mxu0
      %v744 = vadd.f32 0.0, %v743
      %v745 = vpop.f32.mrb[0].mxu0
      %v746 = vpop.f32.mrb[0].mxu0
      %747 = vdwg.mxu0
      %748 = vmatprep.subr.bf16.mxu0 0
      %749 = vmatpush1.bf16.msra.mxu0 %v705
      %750 = vmatprep.subr.bf16.mxu0 0
      %751 = vmatpush1.bf16.msra.mxu0 0
      %752 = vmatprep.subr.bf16.mxu0 0
      %753 = vmatpush1.bf16.msra.mxu0 0
      %754 = vmatprep.subr.bf16.mxu0 0
      %755 = vmatpush1.bf16.msra.mxu0 0
      %756 = vmatprep.subr.bf16.mxu0 0
      %757 = vmatpush1.bf16.msra.mxu0 0
      %758 = vmatprep.subr.bf16.mxu0 0
      %759 = vmatpush1.bf16.msra.mxu0 0
      %760 = vmatprep.subr.bf16.mxu0 0
      %761 = vmatpush1.bf16.msra.mxu0 0
      %762 = vmatprep.subr.bf16.mxu0 0
      %763 = vmatpush1.bf16.msra.mxu0 0
      %764 = vmatprep.subr.bf16.mxu0 0
      %765 = vmatpush1.bf16.msra.mxu0 0
      %766 = vmatprep.subr.bf16.mxu0 0
      %767 = vmatpush1.bf16.msra.mxu0 0
      %768 = vmatprep.subr.bf16.mxu0 0
      %769 = vmatpush1.bf16.msra.mxu0 0
      %770 = vmatprep.subr.bf16.mxu0 0
      %771 = vmatpush1.bf16.msra.mxu0 0
      %772 = vmatprep.subr.bf16.mxu0 0
      %773 = vmatpush1.bf16.msra.mxu0 0
      %774 = vmatprep.subr.bf16.mxu0 0
      %775 = vmatpush1.bf16.msra.mxu0 0
      %776 = vmatprep.subr.bf16.mxu0 0
      %777 = vmatpush1.bf16.msra.mxu0 0
      %778 = vmatprep.subr.bf16.mxu0 0
      %779 = vmatpush1.bf16.msra.mxu0 0
      %780 = vmatprep.mubr.bf16.mxu0 0
      %781 = vmatmul.mubr.bf16.gmra.mrb[0].mxu0 %v696
      %v782 = vpop.f32.mrb[0].mxu0
      %v783 = vadd.f32 0.0, %v782
      %v784 = vpop.f32.mrb[0].mxu0
      %v785 = vpop.f32.mrb[0].mxu0
      %v786 = vpop.f32.mrb[0].mxu0
      %787 = vdwg.mxu0
      %v788 = vadd.f32 %v681, %v742
      %v789 = vadd.f32 %v682, %v744
      %v790 = vadd.f32 %v683, %v783
      %s791 = scalar_lea.vmem %s240, 20
      %v792 = vld [vmem:[%s791] sm:$0xf]
      %793 = vrot.lane.b32.xlu0 %v270, 108
      %v794 = vpop.permute.xlu0 %793
      %795 = vrot.lane.b32.xlu0 %v271, 108
      %v796 = vpop.permute.xlu0 %795
      %797 = vrot.lane.b32.xlu0 %v272, 108
      %v798 = vpop.permute.xlu0 %797
      %vm799 = vcmask 883712
      %v800 = vsel %vm799, %v794, %v796
      %v801 = vsel %vm799, %v796, %v798
      %v803 = vsel %vm282, %v792, 0
      %v806 = vsel %vm286, %v800, 0
      %v809 = vsel %vm286, %v801, 0
      %v812 = vsel %vm286, %v798, 0
      %814 = vmatprep.subr.bf16.mxu0 %v809
      %815 = vmatpush1.bf16.msra.mxu0 %v806
      %816 = vmatprep.subr.bf16.mxu0 0
      %817 = vmatpush1.bf16.msra.mxu0 0
      %818 = vmatprep.subr.bf16.mxu0 0
      %819 = vmatpush1.bf16.msra.mxu0 0
      %820 = vmatprep.subr.bf16.mxu0 0
      %821 = vmatpush1.bf16.msra.mxu0 0
      %822 = vmatprep.subr.bf16.mxu0 0
      %823 = vmatpush1.bf16.msra.mxu0 0
      %824 = vmatprep.subr.bf16.mxu0 0
      %825 = vmatpush1.bf16.msra.mxu0 0
      %826 = vmatprep.subr.bf16.mxu0 0
      %827 = vmatpush1.bf16.msra.mxu0 0
      %828 = vmatprep.subr.bf16.mxu0 0
      %829 = vmatpush1.bf16.msra.mxu0 0
      %830 = vmatprep.subr.bf16.mxu0 0
      %831 = vmatpush1.bf16.msra.mxu0 0
      %832 = vmatprep.subr.bf16.mxu0 0
      %833 = vmatpush1.bf16.msra.mxu0 0
      %834 = vmatprep.subr.bf16.mxu0 0
      %835 = vmatpush1.bf16.msra.mxu0 0
      %836 = vmatprep.subr.bf16.mxu0 0
      %837 = vmatpush1.bf16.msra.mxu0 0
      %838 = vmatprep.subr.bf16.mxu0 0
      %839 = vmatpush1.bf16.msra.mxu0 0
      %840 = vmatprep.subr.bf16.mxu0 0
      %841 = vmatpush1.bf16.msra.mxu0 0
      %842 = vmatprep.subr.bf16.mxu0 0
      %843 = vmatpush1.bf16.msra.mxu0 0
      %844 = vmatprep.subr.bf16.mxu0 0
      %845 = vmatpush1.bf16.msra.mxu0 0
      %846 = vmatprep.mubr.bf16.mxu0 0
      %847 = vmatmul.mubr.bf16.gmra.mrb[0].mxu0 %v803
      %v848 = vpop.f32.mrb[0].mxu0
      %v849 = vadd.f32 0.0, %v848
      %v850 = vpop.f32.mrb[0].mxu0
      %v851 = vadd.f32 0.0, %v850
      %v852 = vpop.f32.mrb[0].mxu0
      %v853 = vpop.f32.mrb[0].mxu0
      %854 = vdwg.mxu0
      %855 = vmatprep.subr.bf16.mxu0 0
      %856 = vmatpush1.bf16.msra.mxu0 %v812
      %857 = vmatprep.subr.bf16.mxu0 0
      %858 = vmatpush1.bf16.msra.mxu0 0
      %859 = vmatprep.subr.bf16.mxu0 0
      %860 = vmatpush1.bf16.msra.mxu0 0
      %861 = vmatprep.subr.bf16.mxu0 0
      %862 = vmatpush1.bf16.msra.mxu0 0
      %863 = vmatprep.subr.bf16.mxu0 0
      %864 = vmatpush1.bf16.msra.mxu0 0
      %865 = vmatprep.subr.bf16.mxu0 0
      %866 = vmatpush1.bf16.msra.mxu0 0
      %867 = vmatprep.subr.bf16.mxu0 0
      %868 = vmatpush1.bf16.msra.mxu0 0
      %869 = vmatprep.subr.bf16.mxu0 0
      %870 = vmatpush1.bf16.msra.mxu0 0
      %871 = vmatprep.subr.bf16.mxu0 0
      %872 = vmatpush1.bf16.msra.mxu0 0
      %873 = vmatprep.subr.bf16.mxu0 0
      %874 = vmatpush1.bf16.msra.mxu0 0
      %875 = vmatprep.subr.bf16.mxu0 0
      %876 = vmatpush1.bf16.msra.mxu0 0
      %877 = vmatprep.subr.bf16.mxu0 0
      %878 = vmatpush1.bf16.msra.mxu0 0
      %879 = vmatprep.subr.bf16.mxu0 0
      %880 = vmatpush1.bf16.msra.mxu0 0
      %881 = vmatprep.subr.bf16.mxu0 0
      %882 = vmatpush1.bf16.msra.mxu0 0
      %883 = vmatprep.subr.bf16.mxu0 0
      %884 = vmatpush1.bf16.msra.mxu0 0
      %885 = vmatprep.subr.bf16.mxu0 0
      %886 = vmatpush1.bf16.msra.mxu0 0
      %887 = vmatprep.mubr.bf16.mxu0 0
      %888 = vmatmul.mubr.bf16.gmra.mrb[0].mxu0 %v803
      %v889 = vpop.f32.mrb[0].mxu0
      %v890 = vadd.f32 0.0, %v889
      %v891 = vpop.f32.mrb[0].mxu0
      %v892 = vpop.f32.mrb[0].mxu0
      %v893 = vpop.f32.mrb[0].mxu0
      %894 = vdwg.mxu0
      %v895 = vadd.f32 %v788, %v849
      %v896 = vadd.f32 %v789, %v851
      %v897 = vadd.f32 %v790, %v890
      %s898 = scalar_lea.vmem %s240, 24
      %v899 = vld [vmem:[%s898] sm:$0xf]
      %900 = vrot.lane.b32.xlu0 %v270, 92
      %v901 = vpop.permute.xlu0 %900
      %902 = vrot.lane.b32.xlu0 %v271, 92
      %v903 = vpop.permute.xlu0 %902
      %904 = vrot.lane.b32.xlu0 %v272, 92
      %v905 = vpop.permute.xlu0 %904
      %vm906 = vcmask 752640
      %v907 = vsel %vm906, %v901, %v903
      %v908 = vsel %vm906, %v903, %v905
      %v910 = vsel %vm282, %v899, 0
      %v913 = vsel %vm286, %v907, 0
      %v916 = vsel %vm286, %v908, 0
      %v919 = vsel %vm286, %v905, 0
      %921 = vmatprep.subr.bf16.mxu0 %v916
      %922 = vmatpush1.bf16.msra.mxu0 %v913
      %923 = vmatprep.subr.bf16.mxu0 0
      %924 = vmatpush1.bf16.msra.mxu0 0
      %925 = vmatprep.subr.bf16.mxu0 0
      %926 = vmatpush1.bf16.msra.mxu0 0
      %927 = vmatprep.subr.bf16.mxu0 0
      %928 = vmatpush1.bf16.msra.mxu0 0
      %929 = vmatprep.subr.bf16.mxu0 0
      %930 = vmatpush1.bf16.msra.mxu0 0
      %931 = vmatprep.subr.bf16.mxu0 0
      %932 = vmatpush1.bf16.msra.mxu0 0
      %933 = vmatprep.subr.bf16.mxu0 0
      %934 = vmatpush1.bf16.msra.mxu0 0
      %935 = vmatprep.subr.bf16.mxu0 0
      %936 = vmatpush1.bf16.msra.mxu0 0
      %937 = vmatprep.subr.bf16.mxu0 0
      %938 = vmatpush1.bf16.msra.mxu0 0
      %939 = vmatprep.subr.bf16.mxu0 0
      %940 = vmatpush1.bf16.msra.mxu0 0
      %941 = vmatprep.subr.bf16.mxu0 0
      %942 = vmatpush1.bf16.msra.mxu0 0
      %943 = vmatprep.subr.bf16.mxu0 0
      %944 = vmatpush1.bf16.msra.mxu0 0
      %945 = vmatprep.subr.bf16.mxu0 0
      %946 = vmatpush1.bf16.msra.mxu0 0
      %947 = vmatprep.subr.bf16.mxu0 0
      %948 = vmatpush1.bf16.msra.mxu0 0
      %949 = vmatprep.subr.bf16.mxu0 0
      %950 = vmatpush1.bf16.msra.mxu0 0
      %951 = vmatprep.subr.bf16.mxu0 0
      %952 = vmatpush1.bf16.msra.mxu0 0
      %953 = vmatprep.mubr.bf16.mxu0 0
      %954 = vmatmul.mubr.bf16.gmra.mrb[0].mxu0 %v910
      %v955 = vpop.f32.mrb[0].mxu0
      %v956 = vadd.f32 0.0, %v955
      %v957 = vpop.f32.mrb[0].mxu0
      %v958 = vadd.f32 0.0, %v957
      %v959 = vpop.f32.mrb[0].mxu0
      %v960 = vpop.f32.mrb[0].mxu0
      %961 = vdwg.mxu0
      %962 = vmatprep.subr.bf16.mxu0 0
      %963 = vmatpush1.bf16.msra.mxu0 %v919
      %964 = vmatprep.subr.bf16.mxu0 0
      %965 = vmatpush1.bf16.msra.mxu0 0
      %966 = vmatprep.subr.bf16.mxu0 0
      %967 = vmatpush1.bf16.msra.mxu0 0
      %968 = vmatprep.subr.bf16.mxu0 0
      %969 = vmatpush1.bf16.msra.mxu0 0
      %970 = vmatprep.subr.bf16.mxu0 0
      %971 = vmatpush1.bf16.msra.mxu0 0
      %972 = vmatprep.subr.bf16.mxu0 0
      %973 = vmatpush1.bf16.msra.mxu0 0
      %974 = vmatprep.subr.bf16.mxu0 0
      %975 = vmatpush1.bf16.msra.mxu0 0
      %976 = vmatprep.subr.bf16.mxu0 0
      %977 = vmatpush1.bf16.msra.mxu0 0
      %978 = vmatprep.subr.bf16.mxu0 0
      %979 = vmatpush1.bf16.msra.mxu0 0
      %980 = vmatprep.subr.bf16.mxu0 0
      %981 = vmatpush1.bf16.msra.mxu0 0
      %982 = vmatprep.subr.bf16.mxu0 0
      %983 = vmatpush1.bf16.msra.mxu0 0
      %984 = vmatprep.subr.bf16.mxu0 0
      %985 = vmatpush1.bf16.msra.mxu0 0
      %986 = vmatprep.subr.bf16.mxu0 0
      %987 = vmatpush1.bf16.msra.mxu0 0
      %988 = vmatprep.subr.bf16.mxu0 0
      %989 = vmatpush1.bf16.msra.mxu0 0
      %990 = vmatprep.subr.bf16.mxu0 0
      %991 = vmatpush1.bf16.msra.mxu0 0
      %992 = vmatprep.subr.bf16.mxu0 0
      %993 = vmatpush1.bf16.msra.mxu0 0
      %994 = vmatprep.mubr.bf16.mxu0 0
      %995 = vmatmul.mubr.bf16.gmra.mrb[0].mxu0 %v910
      %v996 = vpop.f32.mrb[0].mxu0
      %v997 = vadd.f32 0.0, %v996
      %v998 = vpop.f32.mrb[0].mxu0
      %v999 = vpop.f32.mrb[0].mxu0
      %v1000 = vpop.f32.mrb[0].mxu0
      %1001 = vdwg.mxu0
      %v1002 = vadd.f32 %v895, %v956
      %v1003 = vadd.f32 %v896, %v958
      %v1004 = vadd.f32 %v897, %v997
      %s1005 = scalar_lea.vmem %s240, 28
      %v1006 = vld [vmem:[%s1005] sm:$0xf]
      %1007 = vrot.lane.b32.xlu0 %v270, 91
      %v1008 = vpop.permute.xlu0 %1007
      %1009 = vrot.lane.b32.xlu0 %v271, 91
      %v1010 = vpop.permute.xlu0 %1009
      %1011 = vrot.lane.b32.xlu0 %v272, 91
      %v1012 = vpop.permute.xlu0 %1011
      %vm1013 = vcmask 744448
      %v1014 = vsel %vm1013, %v1008, %v1010
      %v1015 = vsel %vm1013, %v1010, %v1012
      %v1017 = vsel %vm282, %v1006, 0
      %v1020 = vsel %vm286, %v1014, 0
      %v1023 = vsel %vm286, %v1015, 0
      %v1026 = vsel %vm286, %v1012, 0
      %1028 = vmatprep.subr.bf16.mxu0 %v1023
      %1029 = vmatpush1.bf16.msra.mxu0 %v1020
      %1030 = vmatprep.subr.bf16.mxu0 0
      %1031 = vmatpush1.bf16.msra.mxu0 0
      %1032 = vmatprep.subr.bf16.mxu0 0
      %1033 = vmatpush1.bf16.msra.mxu0 0
      %1034 = vmatprep.subr.bf16.mxu0 0
      %1035 = vmatpush1.bf16.msra.mxu0 0
      %1036 = vmatprep.subr.bf16.mxu0 0
      %1037 = vmatpush1.bf16.msra.mxu0 0
      %1038 = vmatprep.subr.bf16.mxu0 0
      %1039 = vmatpush1.bf16.msra.mxu0 0
      %1040 = vmatprep.subr.bf16.mxu0 0
      %1041 = vmatpush1.bf16.msra.mxu0 0
      %1042 = vmatprep.subr.bf16.mxu0 0
      %1043 = vmatpush1.bf16.msra.mxu0 0
      %1044 = vmatprep.subr.bf16.mxu0 0
      %1045 = vmatpush1.bf16.msra.mxu0 0
      %1046 = vmatprep.subr.bf16.mxu0 0
      %1047 = vmatpush1.bf16.msra.mxu0 0
      %1048 = vmatprep.subr.bf16.mxu0 0
      %1049 = vmatpush1.bf16.msra.mxu0 0
      %1050 = vmatprep.subr.bf16.mxu0 0
      %1051 = vmatpush1.bf16.msra.mxu0 0
      %1052 = vmatprep.subr.bf16.mxu0 0
      %1053 = vmatpush1.bf16.msra.mxu0 0
      %1054 = vmatprep.subr.bf16.mxu0 0
      %1055 = vmatpush1.bf16.msra.mxu0 0
      %1056 = vmatprep.subr.bf16.mxu0 0
      %1057 = vmatpush1.bf16.msra.mxu0 0
      %1058 = vmatprep.subr.bf16.mxu0 0
      %1059 = vmatpush1.bf16.msra.mxu0 0
      %1060 = vmatprep.mubr.bf16.mxu0 0
      %1061 = vmatmul.mubr.bf16.gmra.mrb[0].mxu0 %v1017
      %v1062 = vpop.f32.mrb[0].mxu0
      %v1063 = vadd.f32 0.0, %v1062
      %v1064 = vpop.f32.mrb[0].mxu0
      %v1065 = vadd.f32 0.0, %v1064
      %v1066 = vpop.f32.mrb[0].mxu0
      %v1067 = vpop.f32.mrb[0].mxu0
      %1068 = vdwg.mxu0
      %1069 = vmatprep.subr.bf16.mxu0 0
      %1070 = vmatpush1.bf16.msra.mxu0 %v1026
      %1071 = vmatprep.subr.bf16.mxu0 0
      %1072 = vmatpush1.bf16.msra.mxu0 0
      %1073 = vmatprep.subr.bf16.mxu0 0
      %1074 = vmatpush1.bf16.msra.mxu0 0
      %1075 = vmatprep.subr.bf16.mxu0 0
      %1076 = vmatpush1.bf16.msra.mxu0 0
      %1077 = vmatprep.subr.bf16.mxu0 0
      %1078 = vmatpush1.bf16.msra.mxu0 0
      %1079 = vmatprep.subr.bf16.mxu0 0
      %1080 = vmatpush1.bf16.msra.mxu0 0
      %1081 = vmatprep.subr.bf16.mxu0 0
      %1082 = vmatpush1.bf16.msra.mxu0 0
      %1083 = vmatprep.subr.bf16.mxu0 0
      %1084 = vmatpush1.bf16.msra.mxu0 0
      %1085 = vmatprep.subr.bf16.mxu0 0
      %1086 = vmatpush1.bf16.msra.mxu0 0
      %1087 = vmatprep.subr.bf16.mxu0 0
      %1088 = vmatpush1.bf16.msra.mxu0 0
      %1089 = vmatprep.subr.bf16.mxu0 0
      %1090 = vmatpush1.bf16.msra.mxu0 0
      %1091 = vmatprep.subr.bf16.mxu0 0
      %1092 = vmatpush1.bf16.msra.mxu0 0
      %1093 = vmatprep.subr.bf16.mxu0 0
      %1094 = vmatpush1.bf16.msra.mxu0 0
      %1095 = vmatprep.subr.bf16.mxu0 0
      %1096 = vmatpush1.bf16.msra.mxu0 0
      %1097 = vmatprep.subr.bf16.mxu0 0
      %1098 = vmatpush1.bf16.msra.mxu0 0
      %1099 = vmatprep.subr.bf16.mxu0 0
      %1100 = vmatpush1.bf16.msra.mxu0 0
      %1101 = vmatprep.mubr.bf16.mxu0 0
      %1102 = vmatmul.mubr.bf16.gmra.mrb[0].mxu0 %v1017
      %v1103 = vpop.f32.mrb[0].mxu0
      %v1104 = vadd.f32 0.0, %v1103
      %v1105 = vpop.f32.mrb[0].mxu0
      %v1106 = vpop.f32.mrb[0].mxu0
      %v1107 = vpop.f32.mrb[0].mxu0
      %1108 = vdwg.mxu0
      %v1109 = vadd.f32 %v1002, %v1063
      %v1110 = vadd.f32 %v1003, %v1065
      %v1111 = vadd.f32 %v1004, %v1104
      %s1112 = scalar_lea.vmem %s240, 32
      %v1113 = vld [vmem:[%s1112] sm:$0xf]
      %1114 = vrot.lane.b32.xlu0 %v270, 90
      %v1115 = vpop.permute.xlu0 %1114
      %1116 = vrot.lane.b32.xlu0 %v271, 90
      %v1117 = vpop.permute.xlu0 %1116
      %1118 = vrot.lane.b32.xlu0 %v272, 90
      %v1119 = vpop.permute.xlu0 %1118
      %vm1120 = vcmask 736256
      %v1121 = vsel %vm1120, %v1115, %v1117
      %v1122 = vsel %vm1120, %v1117, %v1119
      %v1124 = vsel %vm282, %v1113, 0
      %v1127 = vsel %vm286, %v1121, 0
      %v1130 = vsel %vm286, %v1122, 0
      %v1133 = vsel %vm286, %v1119, 0
      %1135 = vmatprep.subr.bf16.mxu0 %v1130
      %1136 = vmatpush1.bf16.msra.mxu0 %v1127
      %1137 = vmatprep.subr.bf16.mxu0 0
      %1138 = vmatpush1.bf16.msra.mxu0 0
      %1139 = vmatprep.subr.bf16.mxu0 0
      %1140 = vmatpush1.bf16.msra.mxu0 0
      %1141 = vmatprep.subr.bf16.mxu0 0
      %1142 = vmatpush1.bf16.msra.mxu0 0
      %1143 = vmatprep.subr.bf16.mxu0 0
      %1144 = vmatpush1.bf16.msra.mxu0 0
      %1145 = vmatprep.subr.bf16.mxu0 0
      %1146 = vmatpush1.bf16.msra.mxu0 0
      %1147 = vmatprep.subr.bf16.mxu0 0
      %1148 = vmatpush1.bf16.msra.mxu0 0
      %1149 = vmatprep.subr.bf16.mxu0 0
      %1150 = vmatpush1.bf16.msra.mxu0 0
      %1151 = vmatprep.subr.bf16.mxu0 0
      %1152 = vmatpush1.bf16.msra.mxu0 0
      %1153 = vmatprep.subr.bf16.mxu0 0
      %1154 = vmatpush1.bf16.msra.mxu0 0
      %1155 = vmatprep.subr.bf16.mxu0 0
      %1156 = vmatpush1.bf16.msra.mxu0 0
      %1157 = vmatprep.subr.bf16.mxu0 0
      %1158 = vmatpush1.bf16.msra.mxu0 0
      %1159 = vmatprep.subr.bf16.mxu0 0
      %1160 = vmatpush1.bf16.msra.mxu0 0
      %1161 = vmatprep.subr.bf16.mxu0 0
      %1162 = vmatpush1.bf16.msra.mxu0 0
      %1163 = vmatprep.subr.bf16.mxu0 0
      %1164 = vmatpush1.bf16.msra.mxu0 0
      %1165 = vmatprep.subr.bf16.mxu0 0
      %1166 = vmatpush1.bf16.msra.mxu0 0
      %1167 = vmatprep.mubr.bf16.mxu0 0
      %1168 = vmatmul.mubr.bf16.gmra.mrb[0].mxu0 %v1124
      %v1169 = vpop.f32.mrb[0].mxu0
      %v1170 = vadd.f32 0.0, %v1169
      %v1171 = vpop.f32.mrb[0].mxu0
      %v1172 = vadd.f32 0.0, %v1171
      %v1173 = vpop.f32.mrb[0].mxu0
      %v1174 = vpop.f32.mrb[0].mxu0
      %1175 = vdwg.mxu0
      %1176 = vmatprep.subr.bf16.mxu0 0
      %1177 = vmatpush1.bf16.msra.mxu0 %v1133
      %1178 = vmatprep.subr.bf16.mxu0 0
      %1179 = vmatpush1.bf16.msra.mxu0 0
      %1180 = vmatprep.subr.bf16.mxu0 0
      %1181 = vmatpush1.bf16.msra.mxu0 0
      %1182 = vmatprep.subr.bf16.mxu0 0
      %1183 = vmatpush1.bf16.msra.mxu0 0
      %1184 = vmatprep.subr.bf16.mxu0 0
      %1185 = vmatpush1.bf16.msra.mxu0 0
      %1186 = vmatprep.subr.bf16.mxu0 0
      %1187 = vmatpush1.bf16.msra.mxu0 0
      %1188 = vmatprep.subr.bf16.mxu0 0
      %1189 = vmatpush1.bf16.msra.mxu0 0
      %1190 = vmatprep.subr.bf16.mxu0 0
      %1191 = vmatpush1.bf16.msra.mxu0 0
      %1192 = vmatprep.subr.bf16.mxu0 0
      %1193 = vmatpush1.bf16.msra.mxu0 0
      %1194 = vmatprep.subr.bf16.mxu0 0
      %1195 = vmatpush1.bf16.msra.mxu0 0
      %1196 = vmatprep.subr.bf16.mxu0 0
      %1197 = vmatpush1.bf16.msra.mxu0 0
      %1198 = vmatprep.subr.bf16.mxu0 0
      %1199 = vmatpush1.bf16.msra.mxu0 0
      %1200 = vmatprep.subr.bf16.mxu0 0
      %1201 = vmatpush1.bf16.msra.mxu0 0
      %1202 = vmatprep.subr.bf16.mxu0 0
      %1203 = vmatpush1.bf16.msra.mxu0 0
      %1204 = vmatprep.subr.bf16.mxu0 0
      %1205 = vmatpush1.bf16.msra.mxu0 0
      %1206 = vmatprep.subr.bf16.mxu0 0
      %1207 = vmatpush1.bf16.msra.mxu0 0
      %1208 = vmatprep.mubr.bf16.mxu0 0
      %1209 = vmatmul.mubr.bf16.gmra.mrb[0].mxu0 %v1124
      %v1210 = vpop.f32.mrb[0].mxu0
      %v1211 = vadd.f32 0.0, %v1210
      %v1212 = vpop.f32.mrb[0].mxu0
      %v1213 = vpop.f32.mrb[0].mxu0
      %v1214 = vpop.f32.mrb[0].mxu0
      %1215 = vdwg.mxu0
      %v1216 = vadd.f32 %v1109, %v1170
      %v1217 = vadd.f32 %v1110, %v1172
      %v1218 = vadd.f32 %v1111, %v1211
      %v1219 = vld [vmem:[%s244] sm:$0xff]
      %1221 = vset.pattern.permute.xlu0 0
      %1222 = vperm.xlu0 %1221, %v1219
      %v1223 = vpop.permute.xlu0 %1222
      %v1225 = vadd.f32 %v1216, %v1223
      %v1226 = vadd.f32 %v1217, %v1223
      %v1227 = vadd.f32 %v1218, %v1223
      %v1228 = vxor.u32 %v1225, 2147483648
      %v1229 = vxor.u32 %v1226, 2147483648
      %v1230 = vxor.u32 %v1227, 2147483648
      %v1231 = vmul.f32 %v1228, 1.442695
      %v1232 = vpow.pop %v1231
      %v1233 = vmul.f32 %v1229, 1.442695
      %v1234 = vpow.pop %v1233
      %v1235 = vmul.f32 %v1230, 1.442695
      %v1236 = vpow.pop %v1235
      %v1237 = vadd.f32 %v1232, 1.0
      %v1238 = vadd.f32 %v1234, 1.0
      %v1239 = vadd.f32 %v1236, 1.0
      %v1240 = vrcp.pop %v1237
      %v1241 = vmul.f32 1.0, %v1240
      %v1242 = vrcp.pop %v1238
      %v1243 = vmul.f32 1.0, %v1242
      %v1244 = vrcp.pop %v1239
      %v1245 = vmul.f32 1.0, %v1244
      %v1246 = vmul.f32 %v1225, %v1241
      %v1247 = vmul.f32 %v1226, %v1243
      %v1248 = vmul.f32 %v1227, %v1245
      %1249 = vst [vmem:[%s257] sm:$0xff] %v1246
      %1250 = vst [vmem:[%s257 + $0x8] sm:$0xff] %v1247
      %vm1251 = vcmask 261120
      %1252 = vst.msk [vmem:[%s257 + $0x10] sm:$0xff] %vm1251, %v1248
      %s1253 = smul.u32 3, %s21
      %p1254 = scmp.lt.s32.totalorder %s19, 1
      %s1255 = scalar_select %p1254, %s19, 1
      %p1256 = scmp.lt.s32.totalorder %s20, 0
      %s1257 = scalar_select %p1256, %s20, 0
      %p1258 = scmp.lt.s32.totalorder %s1253, 2
      %s1259 = scalar_select %p1258, %s1253, 2
      %s1260 = smul.addr %s1257, 3
      %s1261 = sadd.s32 %s1259, %s1260
      %s1262 = smul.addr %s1255, 3
      %s1263 = sadd.s32 %s1261, %s1262
      %s1264 = smul.addr %s1263, 8
      %s1265 = scalar_lea.vmem %s3, %s1264
      // Predicated region
      $region33: #{conv_bn_act.1} parent=31 // pred_check
        %p1266 = pneg %p135
      $region34: #{conv_bn_act.1} parent=31 // pred_check_branch
        %1268 = sbr.rel (%p1266) target = $region36
      $region35: #{conv_bn_act.1} parent=31 // pred_region
        %s1269 = smul.u32 3, %s21
      $region36: #{conv_bn_act.1} parent=31 // pred_fallthru
        _
    $region32: #{conv_bn_act.1} parent=5 // pred_fallthru
      _
    %p1270 = scmp.le.s32.totalorder 2, %s9
    // Predicated region
    $region37: #{conv_bn_act.1} parent=5 // pred_check
      %p1271 = pneg %p1270
    $region38: #{conv_bn_act.1} parent=5 // pred_check_branch
      %1273 = sbr.rel (%p1271) target = $region40
    $region39: #{conv_bn_act.1} parent=5 // pred_region
      %s1274 = ssub.s32 %s9, 2
      // Predicated region
      $region41: #{conv_bn_act.1} parent=39 // pred_check
        %p1275 = pneg %p141
      $region42: #{conv_bn_act.1} parent=39 // pred_check_branch
        %1277 = sbr.rel (%p1275) target = $region44
      $region43: #{conv_bn_act.1} parent=39 // pred_region
        %s1278 = smul.u32 3, %s24
        %p1279 = scmp.lt.s32.totalorder %s22, 1
        %s1280 = scalar_select %p1279, %s22, 1
        %p1281 = scmp.lt.s32.totalorder %s23, 0
        %s1282 = scalar_select %p1281, %s23, 0
        %p1283 = scmp.lt.s32.totalorder %s1278, 2
        %s1284 = scalar_select %p1283, %s1278, 2
        %s1285 = smul.addr %s1282, 3
        %s1286 = sadd.s32 %s1284, %s1285
        %s1287 = smul.addr %s1280, 3
        %s1288 = sadd.s32 %s1286, %s1287
        %s1289 = smul.addr %s1288, 8
        %s1290 = scalar_lea.vmem %s3, %s1289
      $region44: #{conv_bn_act.1} parent=39 // pred_fallthru
        _
    $region40: #{conv_bn_act.1} parent=5 // pred_fallthru
      _
  $region6: #{conv_bn_act.1} parent=0 // loop_footer
    %s13 = sadd.s32 1, %s9
  $region7: #{conv_bn_act.1} parent=0 // loop_footer_branch
    %8 = sbr.rel target = $region3
  $region8: #{conv_bn_act.1} parent=0 // loop_exit
    _

</llo_original>
